<compile_context>
chip_gen: v7x
topology: tpu7x:2x2x1
jax: 0.10.0
libtpu: 0.0.40
codegen_flags: <defaults>
</compile_context>

<pallas_src>
import math
import jax
import jax.numpy as jnp
from jax.experimental import pallas as pl
from jax.experimental.pallas import tpu as pltpu  # noqa: F401  (kept for TPU-specific tuning hooks)

NUM_HEADS = 2
LN_EPS = 1e-12
SPECIAL_TOKEN_POS = 0   # 'USERNAME' not in categorical_features for this synthetic setup

# bf16 MXU operands (f32 accumulation) per review; use jnp.float32 for exact validation.
MM_DTYPE = jnp.bfloat16

_GELU_C = math.sqrt(2.0 / math.pi)


# ----------------------------- kernel helpers ------------------------------

def _layer_norm(x, g, b):
    mu = jnp.mean(x, axis=-1, keepdims=True)
    var = jnp.mean(jnp.square(x - mu), axis=-1, keepdims=True)
    return (x - mu) * jax.lax.rsqrt(var + LN_EPS) * g + b


def _gelu(x):
    # tanh-approximate GELU (EUP tanh); drift vs. exact erf GELU is ~1e-3, accepted by review.
    return 0.5 * x * (1.0 + jnp.tanh(_GELU_C * (x + 0.044715 * x * x * x)))


# ------------------------------- fused kernel -------------------------------

def fused_forward_kernel(x_ref, mask_ref, misc_ref, mats_ref, vecs_ref, o_ref):
    # x_ref:    (B, S, H)   summed embeddings (pre-LN)
    # mask_ref: (B, S)      attention mask (1 = keep)
    # misc_ref: (4, H)      [emb_ln_g, emb_ln_b, head_w, (head_b + pred_bias) broadcast]
    # mats_ref: (L, H, 6H)  per-layer [Wq | Wk | Wv | Wo | W1 | W2]   (I == H)
    # vecs_ref: (L, 10, H)  per-layer [bq, bk, bv, bo, ln1_g, ln1_b, b1, b2, ln2_g, ln2_b]
    # o_ref:    (B, 1)      sigmoid(logit)
    B, S, H = x_ref.shape
    L = mats_ref.shape[0]
    DH = H // NUM_HEADS
    scale = 1.0 / math.sqrt(DH)

    # Flatten batch into the row dimension for all dense matmuls.
    x = x_ref[...].reshape(B * S, H)
    x = _layer_norm(x, misc_ref[0:1, :], misc_ref[1:2, :])          # embedding LayerNorm

    add_mask = ((1.0 - mask_ref[...]) * (-1e9))[:, None, :]         # (B, 1, S)

    for layer in range(L):                                          # static layer loop
        w = mats_ref[layer]                                         # (H, 6H)
        vb = vecs_ref[layer]                                        # (10, H)
        wqkv = w[:, 0:3 * H].astype(MM_DTYPE)
        wo = w[:, 3 * H:4 * H].astype(MM_DTYPE)
        w1 = w[:, 4 * H:5 * H].astype(MM_DTYPE)
        w2 = w[:, 5 * H:6 * H].astype(MM_DTYPE)

        # Fused QKV projection on (B*S, H) rows.
        qkv = jnp.dot(x.astype(MM_DTYPE), wqkv, preferred_element_type=jnp.float32)
        q = qkv[:, 0:H] + vb[0:1, :]
        k = qkv[:, H:2 * H] + vb[1:2, :]
        v = qkv[:, 2 * H:3 * H] + vb[2:3, :]

        attn = jnp.zeros((B * S, H), jnp.float32)
        for h in range(NUM_HEADS):                                  # static head loop
            sl = slice(h * DH, (h + 1) * DH)
            qh = q[:, sl].reshape(B, S, DH).astype(MM_DTYPE)
            kh = k[:, sl].reshape(B, S, DH).astype(MM_DTYPE)
            vh = v[:, sl].reshape(B, S, DH).astype(MM_DTYPE)
            # Scores: contract last dims directly (no explicit transpose).
            s = jnp.einsum('bqd,bkd->bqk', qh, kh,
                           preferred_element_type=jnp.float32) * scale
            s = s + add_mask
            s = s - jnp.max(s, axis=-1, keepdims=True)
            p = jnp.exp(s)
            p = p * pl.reciprocal(jnp.sum(p, axis=-1, keepdims=True), approx=True)
            ctx = jnp.einsum('bqk,bkd->bqd', p.astype(MM_DTYPE), vh,
                             preferred_element_type=jnp.float32)    # (B, S, DH)
            # Fold the head concat into the output projection:
            #   concat_h(ctx_h) @ Wo == sum_h ctx_h @ Wo[h*DH:(h+1)*DH, :]
            attn = attn + jnp.dot(ctx.reshape(B * S, DH).astype(MM_DTYPE),
                                  wo[sl, :], preferred_element_type=jnp.float32)
        attn = attn + vb[3:4, :]
        h1 = _layer_norm(x + attn, vb[4:5, :], vb[5:6, :])

        ff = jnp.dot(h1.astype(MM_DTYPE), w1, preferred_element_type=jnp.float32) + vb[6:7, :]
        ff = _gelu(ff)
        ff = jnp.dot(ff.astype(MM_DTYPE), w2, preferred_element_type=jnp.float32) + vb[7:8, :]
        x = _layer_norm(h1 + ff, vb[8:9, :], vb[9:10, :])

    # Prediction head on the special-token row: VPU multiply + lane reduction (no N=1 matmul).
    target = x.reshape(B, S, H)[:, SPECIAL_TOKEN_POS, :]            # (B, H)
    logit = jnp.sum(target * misc_ref[2:3, :], axis=-1, keepdims=True)
    logit = logit + misc_ref[3:4, 0:1]                              # Linear bias + PredictionLayer bias
    o_ref[...] = jax.nn.sigmoid(logit)


# ------------------------------ wrapper --------------------------------------

def _pack_params(params):
    """Pack per-layer weights into 2 slabs + one misc slab (5 kernel refs total)."""
    H = params["word_emb"].shape[1]
    misc = jnp.stack([
        params["emb_ln_g"],
        params["emb_ln_b"],
        params["head_w"],
        jnp.broadcast_to(params["head_b"] + params["pred_bias"], (H,)),
    ])                                                              # (4, H)
    mats, vecs = [], []
    for lp in params["layers"]:
        mats.append(jnp.concatenate(
            [lp["wq"], lp["wk"], lp["wv"], lp["wo"], lp["w1"], lp["w2"]], axis=1))
        vecs.append(jnp.stack(
            [lp["bq"], lp["bk"], lp["bv"], lp["bo"], lp["ln1_g"], lp["ln1_b"],
             lp["b1"], lp["b2"], lp["ln2_g"], lp["ln2_b"]]))
    return misc, jnp.stack(mats), jnp.stack(vecs)                   # (4,H), (L,H,6H), (L,10,H)


@jax.jit
def transformer_voter_forward(params, input_ids, token_type_ids, attention_mask):
    B, S = input_ids.shape
    # Embedding lookups are gather glue; kept in plain JAX (XLA fuses them).
    emb = (params["word_emb"][input_ids]
           + params["pos_emb"][:S][None, :, :]
           + params["type_emb"][token_type_ids]).astype(jnp.float32)
    mask = attention_mask.astype(jnp.float32)                       # (B, S)
    misc, mats, vecs = _pack_params(params)
    # Single fused kernel, no grid: every ref is a whole-array VMEM block
    # (total ~tens of KB, fits all generations with huge margin).
    return pl.pallas_call(
        fused_forward_kernel,
        out_shape=jax.ShapeDtypeStruct((B, 1), jnp.float32),
    )(emb, mask, misc, mats, vecs)


# --------------------------- parameter init ----------------------------------

def init_params(key, vocab=100, max_pos=64, H=32, n_layers=2):
    # Module's custom BertConfig sets intermediate_size == hidden_size, so I == H.
    def normal(k, shape):
        return (0.02 * jax.random.normal(k, shape)).astype(jnp.float32)

    ks = iter(jax.random.split(key, 64))
    params = {
        "word_emb": normal(next(ks), (vocab, H)),
        "pos_emb": normal(next(ks), (max_pos, H)),
        "type_emb": normal(next(ks), (2, H)),
        "emb_ln_g": jnp.ones((H,), jnp.float32),
        "emb_ln_b": jnp.zeros((H,), jnp.float32),
        "layers": [],
        "head_w": normal(next(ks), (H,)),          # nn.Linear(H, 1) weight
        "head_b": jnp.zeros((), jnp.float32),      # nn.Linear(H, 1) bias
        "pred_bias": jnp.zeros((), jnp.float32),   # PredictionLayer bias
    }
    for _ in range(n_layers):
        lp = {
            "wq": normal(next(ks), (H, H)), "bq": jnp.zeros((H,), jnp.float32),
            "wk": normal(next(ks), (H, H)), "bk": jnp.zeros((H,), jnp.float32),
            "wv": normal(next(ks), (H, H)), "bv": jnp.zeros((H,), jnp.float32),
            "wo": normal(next(ks), (H, H)), "bo": jnp.zeros((H,), jnp.float32),
            "ln1_g": jnp.ones((H,), jnp.float32), "ln1_b": jnp.zeros((H,), jnp.float32),
            "w1": normal(next(ks), (H, H)), "b1": jnp.zeros((H,), jnp.float32),
            "w2": normal(next(ks), (H, H)), "b2": jnp.zeros((H,), jnp.float32),
            "ln2_g": jnp.ones((H,), jnp.float32), "ln2_b": jnp.zeros((H,), jnp.float32),
        }
        params["layers"].append(lp)
    return params


# TODO(synk): tokenizer construction, optimizer/metrics setup, and regularization
# bookkeeping in GeneralModel.__init__/post_init are host-side training infra and
# not part of the forward pass; they are intentionally not translated.

if __name__ == "__main__":
    B, S, H, VOCAB = 2, 8, 32, 100

    key = jax.random.PRNGKey(0)
    k_params, k_ids = jax.random.split(key)

    params = init_params(k_params, vocab=VOCAB, max_pos=64, H=H, n_layers=2)

    input_ids = jax.random.randint(k_ids, (B, S), 0, VOCAB, dtype=jnp.int32)
    token_type_ids = jnp.zeros((B, S), dtype=jnp.int32)
    attention_mask = jnp.array([[1, 1, 1, 1, 1, 1, 1, 1],
                                [1, 1, 1, 1, 1, 1, 0, 0]], dtype=jnp.int32)

    out = transformer_voter_forward(params, input_ids, token_type_ids, attention_mask)
    out = jax.block_until_ready(out)
    assert out.shape == (B, 1)
    assert bool(jnp.all((out >= 0.0) & (out <= 1.0)))
    print("KERNEL_OK")
</pallas_src>

<mosaic_0001>
module attributes {stable_mosaic.version = 11 : i64} {
  func.func @fused_forward_kernel(%arg0: memref<2x8x32xf32, #tpu.memory_space<vmem>>, %arg1: memref<2x8xf32, #tpu.memory_space<vmem>>, %arg2: memref<4x32xf32, #tpu.memory_space<vmem>>, %arg3: memref<2x32x192xf32, #tpu.memory_space<vmem>>, %arg4: memref<2x10x32xf32, #tpu.memory_space<vmem>>, %arg5: memref<2x1xf32, #tpu.memory_space<vmem>>) attributes {dimension_semantics = [], scalar_prefetch = 0 : i64, scratch_operands = 0 : i64, tpu.core_type = #tpu.core_type<tc>} {
    %c0 = arith.constant 0 : index
    %c0_0 = arith.constant 0 : index
    %c0_1 = arith.constant 0 : index
    %0 = vector.load %arg0[%c0, %c0_0, %c0_1] : memref<2x8x32xf32, #tpu.memory_space<vmem>>, vector<2x8x32xf32>
    %1 = vector.shape_cast %0 : vector<2x8x32xf32> to vector<16x32xf32>
    %c0_2 = arith.constant 0 : index
    %c0_3 = arith.constant 0 : index
    %2 = vector.load %arg2[%c0_2, %c0_3] : memref<4x32xf32, #tpu.memory_space<vmem>>, vector<1x32xf32>
    %c1 = arith.constant 1 : index
    %c0_4 = arith.constant 0 : index
    %3 = vector.load %arg2[%c1, %c0_4] : memref<4x32xf32, #tpu.memory_space<vmem>>, vector<1x32xf32>
    %cst = arith.constant dense<0.000000e+00> : vector<16xf32>
    %4 = vector.multi_reduction <add>, %1, %cst [1] : vector<16x32xf32> to vector<16xf32>
    %5 = vector.shape_cast %4 : vector<16xf32> to vector<16x1xf32>
    %cst_5 = arith.constant 3.200000e+01 : f32
    %6 = vector.broadcast %cst_5 : f32 to vector<16x1xf32>
    %7 = arith.divf %5, %6 : vector<16x1xf32>
    %8 = vector.broadcast %7 : vector<16x1xf32> to vector<16x32xf32>
    %9 = arith.subf %1, %8 : vector<16x32xf32>
    %10 = arith.mulf %9, %9 : vector<16x32xf32>
    %cst_6 = arith.constant dense<0.000000e+00> : vector<16xf32>
    %11 = vector.multi_reduction <add>, %10, %cst_6 [1] : vector<16x32xf32> to vector<16xf32>
    %12 = vector.shape_cast %11 : vector<16xf32> to vector<16x1xf32>
    %cst_7 = arith.constant 3.200000e+01 : f32
    %13 = vector.broadcast %cst_7 : f32 to vector<16x1xf32>
    %14 = arith.divf %12, %13 : vector<16x1xf32>
    %15 = vector.broadcast %7 : vector<16x1xf32> to vector<16x32xf32>
    %16 = arith.subf %1, %15 : vector<16x32xf32>
    %cst_8 = arith.constant 9.99999996E-13 : f32
    %17 = vector.broadcast %cst_8 : f32 to vector<16x1xf32>
    %18 = arith.addf %14, %17 : vector<16x1xf32>
    %19 = math.rsqrt %18 : vector<16x1xf32>
    %20 = vector.broadcast %19 : vector<16x1xf32> to vector<16x32xf32>
    %21 = arith.mulf %16, %20 : vector<16x32xf32>
    %22 = vector.broadcast %2 : vector<1x32xf32> to vector<16x32xf32>
    %23 = arith.mulf %21, %22 : vector<16x32xf32>
    %24 = vector.broadcast %3 : vector<1x32xf32> to vector<16x32xf32>
    %25 = arith.addf %23, %24 : vector<16x32xf32>
    %c0_9 = arith.constant 0 : index
    %c0_10 = arith.constant 0 : index
    %26 = vector.load %arg1[%c0_9, %c0_10] : memref<2x8xf32, #tpu.memory_space<vmem>>, vector<2x8xf32>
    %cst_11 = arith.constant 1.000000e+00 : f32
    %27 = vector.broadcast %cst_11 : f32 to vector<2x8xf32>
    %28 = arith.subf %27, %26 : vector<2x8xf32>
    %cst_12 = arith.constant -1.000000e+09 : f32
    %29 = vector.broadcast %cst_12 : f32 to vector<2x8xf32>
    %30 = arith.mulf %28, %29 : vector<2x8xf32>
    %31 = vector.shape_cast %30 : vector<2x8xf32> to vector<2x1x8xf32>
    %c0_13 = arith.constant 0 : index
    %c0_14 = arith.constant 0 : index
    %c0_15 = arith.constant 0 : index
    %32 = vector.load %arg3[%c0_13, %c0_14, %c0_15] : memref<2x32x192xf32, #tpu.memory_space<vmem>>, vector<1x32x192xf32>
    %33 = vector.shape_cast %32 : vector<1x32x192xf32> to vector<32x192xf32>
    %c0_16 = arith.constant 0 : index
    %c0_17 = arith.constant 0 : index
    %c0_18 = arith.constant 0 : index
    %34 = vector.load %arg4[%c0_16, %c0_17, %c0_18] : memref<2x10x32xf32, #tpu.memory_space<vmem>>, vector<1x10x32xf32>
    %35 = vector.shape_cast %34 : vector<1x10x32xf32> to vector<10x32xf32>
    %36 = vector.extract_strided_slice %33 {offsets = [0, 0], sizes = [32, 96], strides = [1, 1]} : vector<32x192xf32> to vector<32x96xf32>
    %37 = arith.truncf %36 : vector<32x96xf32> to vector<32x96xbf16>
    %38 = vector.extract_strided_slice %33 {offsets = [0, 96], sizes = [32, 32], strides = [1, 1]} : vector<32x192xf32> to vector<32x32xf32>
    %39 = arith.truncf %38 : vector<32x32xf32> to vector<32x32xbf16>
    %40 = vector.extract_strided_slice %33 {offsets = [0, 128], sizes = [32, 32], strides = [1, 1]} : vector<32x192xf32> to vector<32x32xf32>
    %41 = arith.truncf %40 : vector<32x32xf32> to vector<32x32xbf16>
    %42 = vector.extract_strided_slice %33 {offsets = [0, 160], sizes = [32, 32], strides = [1, 1]} : vector<32x192xf32> to vector<32x32xf32>
    %43 = arith.truncf %42 : vector<32x32xf32> to vector<32x32xbf16>
    %44 = arith.truncf %25 : vector<16x32xf32> to vector<16x32xbf16>
    %cst_19 = arith.constant dense<0.000000e+00> : vector<16x96xf32>
    %45 = tpu.matmul %44, %37, %cst_19 {dimension_numbers = #tpu.dot_dimension_numbers<[1], [0], [0], [1], [0, 0, 1, 1], [], []>} : vector<16x32xbf16>, vector<32x96xbf16>, vector<16x96xf32> -> vector<16x96xf32>
    %46 = vector.extract_strided_slice %45 {offsets = [0, 0], sizes = [16, 32], strides = [1, 1]} : vector<16x96xf32> to vector<16x32xf32>
    %47 = vector.extract_strided_slice %35 {offsets = [0, 0], sizes = [1, 32], strides = [1, 1]} : vector<10x32xf32> to vector<1x32xf32>
    %48 = vector.broadcast %47 : vector<1x32xf32> to vector<16x32xf32>
    %49 = arith.addf %46, %48 : vector<16x32xf32>
    %50 = vector.extract_strided_slice %45 {offsets = [0, 32], sizes = [16, 32], strides = [1, 1]} : vector<16x96xf32> to vector<16x32xf32>
    %51 = vector.extract_strided_slice %35 {offsets = [1, 0], sizes = [1, 32], strides = [1, 1]} : vector<10x32xf32> to vector<1x32xf32>
    %52 = vector.broadcast %51 : vector<1x32xf32> to vector<16x32xf32>
    %53 = arith.addf %50, %52 : vector<16x32xf32>
    %54 = vector.extract_strided_slice %45 {offsets = [0, 64], sizes = [16, 32], strides = [1, 1]} : vector<16x96xf32> to vector<16x32xf32>
    %55 = vector.extract_strided_slice %35 {offsets = [2, 0], sizes = [1, 32], strides = [1, 1]} : vector<10x32xf32> to vector<1x32xf32>
    %56 = vector.broadcast %55 : vector<1x32xf32> to vector<16x32xf32>
    %57 = arith.addf %54, %56 : vector<16x32xf32>
    %cst_20 = arith.constant 0.000000e+00 : f32
    %58 = vector.broadcast %cst_20 : f32 to vector<16x32xf32>
    %59 = vector.extract_strided_slice %49 {offsets = [0, 0], sizes = [16, 16], strides = [1, 1]} : vector<16x32xf32> to vector<16x16xf32>
    %60 = vector.shape_cast %59 : vector<16x16xf32> to vector<2x8x16xf32>
    %61 = arith.truncf %60 : vector<2x8x16xf32> to vector<2x8x16xbf16>
    %62 = vector.extract_strided_slice %53 {offsets = [0, 0], sizes = [16, 16], strides = [1, 1]} : vector<16x32xf32> to vector<16x16xf32>
    %63 = vector.shape_cast %62 : vector<16x16xf32> to vector<2x8x16xf32>
    %64 = arith.truncf %63 : vector<2x8x16xf32> to vector<2x8x16xbf16>
    %65 = vector.extract_strided_slice %57 {offsets = [0, 0], sizes = [16, 16], strides = [1, 1]} : vector<16x32xf32> to vector<16x16xf32>
    %66 = vector.shape_cast %65 : vector<16x16xf32> to vector<2x8x16xf32>
    %67 = arith.truncf %66 : vector<2x8x16xf32> to vector<2x8x16xbf16>
    "tpu.trace_start"() <{level = 10 : i32, message = "bqd,bkd->bqk"}> : () -> ()
    %cst_21 = arith.constant dense<0.000000e+00> : vector<2x8x8xf32>
    %68 = tpu.matmul %61, %64, %cst_21 {dimension_numbers = #tpu.dot_dimension_numbers<[2], [2], [1], [1], [0, 0, 0, 1, 1, 1], [0], [0]>} : vector<2x8x16xbf16>, vector<2x8x16xbf16>, vector<2x8x8xf32> -> vector<2x8x8xf32>
    "tpu.trace_stop"() : () -> ()
    %cst_22 = arith.constant 2.500000e-01 : f32
    %69 = vector.broadcast %cst_22 : f32 to vector<2x8x8xf32>
    %70 = arith.mulf %68, %69 : vector<2x8x8xf32>
    %71 = vector.broadcast %31 : vector<2x1x8xf32> to vector<2x8x8xf32>
    %72 = arith.addf %70, %71 : vector<2x8x8xf32>
    %cst_23 = arith.constant dense<0xFF800000> : vector<2x8xf32>
    %73 = vector.multi_reduction <maximumf>, %72, %cst_23 [2] : vector<2x8x8xf32> to vector<2x8xf32>
    %74 = vector.shape_cast %73 : vector<2x8xf32> to vector<2x8x1xf32>
    %75 = vector.broadcast %74 : vector<2x8x1xf32> to vector<2x8x8xf32>
    %76 = arith.subf %72, %75 : vector<2x8x8xf32>
    %77 = math.exp %76 : vector<2x8x8xf32>
    %cst_24 = arith.constant dense<0.000000e+00> : vector<2x8xf32>
    %78 = vector.multi_reduction <add>, %77, %cst_24 [2] : vector<2x8x8xf32> to vector<2x8xf32>
    %79 = vector.shape_cast %78 : vector<2x8xf32> to vector<2x8x1xf32>
    %80 = tpu.reciprocal %79 {approx = true} : vector<2x8x1xf32> -> vector<2x8x1xf32>
    %81 = vector.broadcast %80 : vector<2x8x1xf32> to vector<2x8x8xf32>
    %82 = arith.mulf %77, %81 : vector<2x8x8xf32>
    %83 = arith.truncf %82 : vector<2x8x8xf32> to vector<2x8x8xbf16>
    "tpu.trace_start"() <{level = 10 : i32, message = "bqk,bkd->bqd"}> : () -> ()
    %cst_25 = arith.constant dense<0.000000e+00> : vector<2x8x16xf32>
    %84 = tpu.matmul %83, %67, %cst_25 {dimension_numbers = #tpu.dot_dimension_numbers<[2], [1], [1], [2], [0, 0, 0, 1, 1, 2], [0], [0]>} : vector<2x8x8xbf16>, vector<2x8x16xbf16>, vector<2x8x16xf32> -> vector<2x8x16xf32>
    "tpu.trace_stop"() : () -> ()
    %85 = vector.shape_cast %84 : vector<2x8x16xf32> to vector<16x16xf32>
    %86 = arith.truncf %85 : vector<16x16xf32> to vector<16x16xbf16>
    %87 = vector.extract_strided_slice %39 {offsets = [0, 0], sizes = [16, 32], strides = [1, 1]} : vector<32x32xbf16> to vector<16x32xbf16>
    %cst_26 = arith.constant dense<0.000000e+00> : vector<16x32xf32>
    %88 = tpu.matmul %86, %87, %cst_26 {dimension_numbers = #tpu.dot_dimension_numbers<[1], [0], [0], [1], [0, 0, 1, 1], [], []>} : vector<16x16xbf16>, vector<16x32xbf16>, vector<16x32xf32> -> vector<16x32xf32>
    %89 = arith.addf %58, %88 : vector<16x32xf32>
    %90 = vector.extract_strided_slice %49 {offsets = [0, 16], sizes = [16, 16], strides = [1, 1]} : vector<16x32xf32> to vector<16x16xf32>
    %91 = vector.shape_cast %90 : vector<16x16xf32> to vector<2x8x16xf32>
    %92 = arith.truncf %91 : vector<2x8x16xf32> to vector<2x8x16xbf16>
    %93 = vector.extract_strided_slice %53 {offsets = [0, 16], sizes = [16, 16], strides = [1, 1]} : vector<16x32xf32> to vector<16x16xf32>
    %94 = vector.shape_cast %93 : vector<16x16xf32> to vector<2x8x16xf32>
    %95 = arith.truncf %94 : vector<2x8x16xf32> to vector<2x8x16xbf16>
    %96 = vector.extract_strided_slice %57 {offsets = [0, 16], sizes = [16, 16], strides = [1, 1]} : vector<16x32xf32> to vector<16x16xf32>
    %97 = vector.shape_cast %96 : vector<16x16xf32> to vector<2x8x16xf32>
    %98 = arith.truncf %97 : vector<2x8x16xf32> to vector<2x8x16xbf16>
    "tpu.trace_start"() <{level = 10 : i32, message = "bqd,bkd->bqk"}> : () -> ()
    %cst_27 = arith.constant dense<0.000000e+00> : vector<2x8x8xf32>
    %99 = tpu.matmul %92, %95, %cst_27 {dimension_numbers = #tpu.dot_dimension_numbers<[2], [2], [1], [1], [0, 0, 0, 1, 1, 1], [0], [0]>} : vector<2x8x16xbf16>, vector<2x8x16xbf16>, vector<2x8x8xf32> -> vector<2x8x8xf32>
    "tpu.trace_stop"() : () -> ()
    %cst_28 = arith.constant 2.500000e-01 : f32
    %100 = vector.broadcast %cst_28 : f32 to vector<2x8x8xf32>
    %101 = arith.mulf %99, %100 : vector<2x8x8xf32>
    %102 = vector.broadcast %31 : vector<2x1x8xf32> to vector<2x8x8xf32>
    %103 = arith.addf %101, %102 : vector<2x8x8xf32>
    %cst_29 = arith.constant dense<0xFF800000> : vector<2x8xf32>
    %104 = vector.multi_reduction <maximumf>, %103, %cst_29 [2] : vector<2x8x8xf32> to vector<2x8xf32>
    %105 = vector.shape_cast %104 : vector<2x8xf32> to vector<2x8x1xf32>
    %106 = vector.broadcast %105 : vector<2x8x1xf32> to vector<2x8x8xf32>
    %107 = arith.subf %103, %106 : vector<2x8x8xf32>
    %108 = math.exp %107 : vector<2x8x8xf32>
    %cst_30 = arith.constant dense<0.000000e+00> : vector<2x8xf32>
    %109 = vector.multi_reduction <add>, %108, %cst_30 [2] : vector<2x8x8xf32> to vector<2x8xf32>
    %110 = vector.shape_cast %109 : vector<2x8xf32> to vector<2x8x1xf32>
    %111 = tpu.reciprocal %110 {approx = true} : vector<2x8x1xf32> -> vector<2x8x1xf32>
    %112 = vector.broadcast %111 : vector<2x8x1xf32> to vector<2x8x8xf32>
    %113 = arith.mulf %108, %112 : vector<2x8x8xf32>
    %114 = arith.truncf %113 : vector<2x8x8xf32> to vector<2x8x8xbf16>
    "tpu.trace_start"() <{level = 10 : i32, message = "bqk,bkd->bqd"}> : () -> ()
    %cst_31 = arith.constant dense<0.000000e+00> : vector<2x8x16xf32>
    %115 = tpu.matmul %114, %98, %cst_31 {dimension_numbers = #tpu.dot_dimension_numbers<[2], [1], [1], [2], [0, 0, 0, 1, 1, 2], [0], [0]>} : vector<2x8x8xbf16>, vector<2x8x16xbf16>, vector<2x8x16xf32> -> vector<2x8x16xf32>
    "tpu.trace_stop"() : () -> ()
    %116 = vector.shape_cast %115 : vector<2x8x16xf32> to vector<16x16xf32>
    %117 = arith.truncf %116 : vector<16x16xf32> to vector<16x16xbf16>
    %118 = vector.extract_strided_slice %39 {offsets = [16, 0], sizes = [16, 32], strides = [1, 1]} : vector<32x32xbf16> to vector<16x32xbf16>
    %cst_32 = arith.constant dense<0.000000e+00> : vector<16x32xf32>
    %119 = tpu.matmul %117, %118, %cst_32 {dimension_numbers = #tpu.dot_dimension_numbers<[1], [0], [0], [1], [0, 0, 1, 1], [], []>} : vector<16x16xbf16>, vector<16x32xbf16>, vector<16x32xf32> -> vector<16x32xf32>
    %120 = arith.addf %89, %119 : vector<16x32xf32>
    %121 = vector.extract_strided_slice %35 {offsets = [3, 0], sizes = [1, 32], strides = [1, 1]} : vector<10x32xf32> to vector<1x32xf32>
    %122 = vector.broadcast %121 : vector<1x32xf32> to vector<16x32xf32>
    %123 = arith.addf %120, %122 : vector<16x32xf32>
    %124 = arith.addf %25, %123 : vector<16x32xf32>
    %125 = vector.extract_strided_slice %35 {offsets = [4, 0], sizes = [1, 32], strides = [1, 1]} : vector<10x32xf32> to vector<1x32xf32>
    %126 = vector.extract_strided_slice %35 {offsets = [5, 0], sizes = [1, 32], strides = [1, 1]} : vector<10x32xf32> to vector<1x32xf32>
    %cst_33 = arith.constant dense<0.000000e+00> : vector<16xf32>
    %127 = vector.multi_reduction <add>, %124, %cst_33 [1] : vector<16x32xf32> to vector<16xf32>
    %128 = vector.shape_cast %127 : vector<16xf32> to vector<16x1xf32>
    %cst_34 = arith.constant 3.200000e+01 : f32
    %129 = vector.broadcast %cst_34 : f32 to vector<16x1xf32>
    %130 = arith.divf %128, %129 : vector<16x1xf32>
    %131 = vector.broadcast %130 : vector<16x1xf32> to vector<16x32xf32>
    %132 = arith.subf %124, %131 : vector<16x32xf32>
    %133 = arith.mulf %132, %132 : vector<16x32xf32>
    %cst_35 = arith.constant dense<0.000000e+00> : vector<16xf32>
    %134 = vector.multi_reduction <add>, %133, %cst_35 [1] : vector<16x32xf32> to vector<16xf32>
    %135 = vector.shape_cast %134 : vector<16xf32> to vector<16x1xf32>
    %cst_36 = arith.constant 3.200000e+01 : f32
    %136 = vector.broadcast %cst_36 : f32 to vector<16x1xf32>
    %137 = arith.divf %135, %136 : vector<16x1xf32>
    %138 = vector.broadcast %130 : vector<16x1xf32> to vector<16x32xf32>
    %139 = arith.subf %124, %138 : vector<16x32xf32>
    %cst_37 = arith.constant 9.99999996E-13 : f32
    %140 = vector.broadcast %cst_37 : f32 to vector<16x1xf32>
    %141 = arith.addf %137, %140 : vector<16x1xf32>
    %142 = math.rsqrt %141 : vector<16x1xf32>
    %143 = vector.broadcast %142 : vector<16x1xf32> to vector<16x32xf32>
    %144 = arith.mulf %139, %143 : vector<16x32xf32>
    %145 = vector.broadcast %125 : vector<1x32xf32> to vector<16x32xf32>
    %146 = arith.mulf %144, %145 : vector<16x32xf32>
    %147 = vector.broadcast %126 : vector<1x32xf32> to vector<16x32xf32>
    %148 = arith.addf %146, %147 : vector<16x32xf32>
    %149 = arith.truncf %148 : vector<16x32xf32> to vector<16x32xbf16>
    %cst_38 = arith.constant dense<0.000000e+00> : vector<16x32xf32>
    %150 = tpu.matmul %149, %41, %cst_38 {dimension_numbers = #tpu.dot_dimension_numbers<[1], [0], [0], [1], [0, 0, 1, 1], [], []>} : vector<16x32xbf16>, vector<32x32xbf16>, vector<16x32xf32> -> vector<16x32xf32>
    %151 = vector.extract_strided_slice %35 {offsets = [6, 0], sizes = [1, 32], strides = [1, 1]} : vector<10x32xf32> to vector<1x32xf32>
    %152 = vector.broadcast %151 : vector<1x32xf32> to vector<16x32xf32>
    %153 = arith.addf %150, %152 : vector<16x32xf32>
    %cst_39 = arith.constant 5.000000e-01 : f32
    %154 = vector.broadcast %cst_39 : f32 to vector<16x32xf32>
    %155 = arith.mulf %154, %153 : vector<16x32xf32>
    %cst_40 = arith.constant 4.471500e-02 : f32
    %156 = vector.broadcast %cst_40 : f32 to vector<16x32xf32>
    %157 = arith.mulf %156, %153 : vector<16x32xf32>
    %158 = arith.mulf %157, %153 : vector<16x32xf32>
    %159 = arith.mulf %158, %153 : vector<16x32xf32>
    %160 = arith.addf %153, %159 : vector<16x32xf32>
    %cst_41 = arith.constant 0.797884583 : f32
    %161 = vector.broadcast %cst_41 : f32 to vector<16x32xf32>
    %162 = arith.mulf %161, %160 : vector<16x32xf32>
    %163 = math.tanh %162 : vector<16x32xf32>
    %cst_42 = arith.constant 1.000000e+00 : f32
    %164 = vector.broadcast %cst_42 : f32 to vector<16x32xf32>
    %165 = arith.addf %164, %163 : vector<16x32xf32>
    %166 = arith.mulf %155, %165 : vector<16x32xf32>
    %167 = arith.truncf %166 : vector<16x32xf32> to vector<16x32xbf16>
    %cst_43 = arith.constant dense<0.000000e+00> : vector<16x32xf32>
    %168 = tpu.matmul %167, %43, %cst_43 {dimension_numbers = #tpu.dot_dimension_numbers<[1], [0], [0], [1], [0, 0, 1, 1], [], []>} : vector<16x32xbf16>, vector<32x32xbf16>, vector<16x32xf32> -> vector<16x32xf32>
    %169 = vector.extract_strided_slice %35 {offsets = [7, 0], sizes = [1, 32], strides = [1, 1]} : vector<10x32xf32> to vector<1x32xf32>
    %170 = vector.broadcast %169 : vector<1x32xf32> to vector<16x32xf32>
    %171 = arith.addf %168, %170 : vector<16x32xf32>
    %172 = arith.addf %148, %171 : vector<16x32xf32>
    %173 = vector.extract_strided_slice %35 {offsets = [8, 0], sizes = [1, 32], strides = [1, 1]} : vector<10x32xf32> to vector<1x32xf32>
    %174 = vector.extract_strided_slice %35 {offsets = [9, 0], sizes = [1, 32], strides = [1, 1]} : vector<10x32xf32> to vector<1x32xf32>
    %cst_44 = arith.constant dense<0.000000e+00> : vector<16xf32>
    %175 = vector.multi_reduction <add>, %172, %cst_44 [1] : vector<16x32xf32> to vector<16xf32>
    %176 = vector.shape_cast %175 : vector<16xf32> to vector<16x1xf32>
    %cst_45 = arith.constant 3.200000e+01 : f32
    %177 = vector.broadcast %cst_45 : f32 to vector<16x1xf32>
    %178 = arith.divf %176, %177 : vector<16x1xf32>
    %179 = vector.broadcast %178 : vector<16x1xf32> to vector<16x32xf32>
    %180 = arith.subf %172, %179 : vector<16x32xf32>
    %181 = arith.mulf %180, %180 : vector<16x32xf32>
    %cst_46 = arith.constant dense<0.000000e+00> : vector<16xf32>
    %182 = vector.multi_reduction <add>, %181, %cst_46 [1] : vector<16x32xf32> to vector<16xf32>
    %183 = vector.shape_cast %182 : vector<16xf32> to vector<16x1xf32>
    %cst_47 = arith.constant 3.200000e+01 : f32
    %184 = vector.broadcast %cst_47 : f32 to vector<16x1xf32>
    %185 = arith.divf %183, %184 : vector<16x1xf32>
    %186 = vector.broadcast %178 : vector<16x1xf32> to vector<16x32xf32>
    %187 = arith.subf %172, %186 : vector<16x32xf32>
    %cst_48 = arith.constant 9.99999996E-13 : f32
    %188 = vector.broadcast %cst_48 : f32 to vector<16x1xf32>
    %189 = arith.addf %185, %188 : vector<16x1xf32>
    %190 = math.rsqrt %189 : vector<16x1xf32>
    %191 = vector.broadcast %190 : vector<16x1xf32> to vector<16x32xf32>
    %192 = arith.mulf %187, %191 : vector<16x32xf32>
    %193 = vector.broadcast %173 : vector<1x32xf32> to vector<16x32xf32>
    %194 = arith.mulf %192, %193 : vector<16x32xf32>
    %195 = vector.broadcast %174 : vector<1x32xf32> to vector<16x32xf32>
    %196 = arith.addf %194, %195 : vector<16x32xf32>
    %c1_49 = arith.constant 1 : index
    %c0_50 = arith.constant 0 : index
    %c0_51 = arith.constant 0 : index
    %197 = vector.load %arg3[%c1_49, %c0_50, %c0_51] : memref<2x32x192xf32, #tpu.memory_space<vmem>>, vector<1x32x192xf32>
    %198 = vector.shape_cast %197 : vector<1x32x192xf32> to vector<32x192xf32>
    %c1_52 = arith.constant 1 : index
    %c0_53 = arith.constant 0 : index
    %c0_54 = arith.constant 0 : index
    %199 = vector.load %arg4[%c1_52, %c0_53, %c0_54] : memref<2x10x32xf32, #tpu.memory_space<vmem>>, vector<1x10x32xf32>
    %200 = vector.shape_cast %199 : vector<1x10x32xf32> to vector<10x32xf32>
    %201 = vector.extract_strided_slice %198 {offsets = [0, 0], sizes = [32, 96], strides = [1, 1]} : vector<32x192xf32> to vector<32x96xf32>
    %202 = arith.truncf %201 : vector<32x96xf32> to vector<32x96xbf16>
    %203 = vector.extract_strided_slice %198 {offsets = [0, 96], sizes = [32, 32], strides = [1, 1]} : vector<32x192xf32> to vector<32x32xf32>
    %204 = arith.truncf %203 : vector<32x32xf32> to vector<32x32xbf16>
    %205 = vector.extract_strided_slice %198 {offsets = [0, 128], sizes = [32, 32], strides = [1, 1]} : vector<32x192xf32> to vector<32x32xf32>
    %206 = arith.truncf %205 : vector<32x32xf32> to vector<32x32xbf16>
    %207 = vector.extract_strided_slice %198 {offsets = [0, 160], sizes = [32, 32], strides = [1, 1]} : vector<32x192xf32> to vector<32x32xf32>
    %208 = arith.truncf %207 : vector<32x32xf32> to vector<32x32xbf16>
    %209 = arith.truncf %196 : vector<16x32xf32> to vector<16x32xbf16>
    %cst_55 = arith.constant dense<0.000000e+00> : vector<16x96xf32>
    %210 = tpu.matmul %209, %202, %cst_55 {dimension_numbers = #tpu.dot_dimension_numbers<[1], [0], [0], [1], [0, 0, 1, 1], [], []>} : vector<16x32xbf16>, vector<32x96xbf16>, vector<16x96xf32> -> vector<16x96xf32>
    %211 = vector.extract_strided_slice %210 {offsets = [0, 0], sizes = [16, 32], strides = [1, 1]} : vector<16x96xf32> to vector<16x32xf32>
    %212 = vector.extract_strided_slice %200 {offsets = [0, 0], sizes = [1, 32], strides = [1, 1]} : vector<10x32xf32> to vector<1x32xf32>
    %213 = vector.broadcast %212 : vector<1x32xf32> to vector<16x32xf32>
    %214 = arith.addf %211, %213 : vector<16x32xf32>
    %215 = vector.extract_strided_slice %210 {offsets = [0, 32], sizes = [16, 32], strides = [1, 1]} : vector<16x96xf32> to vector<16x32xf32>
    %216 = vector.extract_strided_slice %200 {offsets = [1, 0], sizes = [1, 32], strides = [1, 1]} : vector<10x32xf32> to vector<1x32xf32>
    %217 = vector.broadcast %216 : vector<1x32xf32> to vector<16x32xf32>
    %218 = arith.addf %215, %217 : vector<16x32xf32>
    %219 = vector.extract_strided_slice %210 {offsets = [0, 64], sizes = [16, 32], strides = [1, 1]} : vector<16x96xf32> to vector<16x32xf32>
    %220 = vector.extract_strided_slice %200 {offsets = [2, 0], sizes = [1, 32], strides = [1, 1]} : vector<10x32xf32> to vector<1x32xf32>
    %221 = vector.broadcast %220 : vector<1x32xf32> to vector<16x32xf32>
    %222 = arith.addf %219, %221 : vector<16x32xf32>
    %cst_56 = arith.constant 0.000000e+00 : f32
    %223 = vector.broadcast %cst_56 : f32 to vector<16x32xf32>
    %224 = vector.extract_strided_slice %214 {offsets = [0, 0], sizes = [16, 16], strides = [1, 1]} : vector<16x32xf32> to vector<16x16xf32>
    %225 = vector.shape_cast %224 : vector<16x16xf32> to vector<2x8x16xf32>
    %226 = arith.truncf %225 : vector<2x8x16xf32> to vector<2x8x16xbf16>
    %227 = vector.extract_strided_slice %218 {offsets = [0, 0], sizes = [16, 16], strides = [1, 1]} : vector<16x32xf32> to vector<16x16xf32>
    %228 = vector.shape_cast %227 : vector<16x16xf32> to vector<2x8x16xf32>
    %229 = arith.truncf %228 : vector<2x8x16xf32> to vector<2x8x16xbf16>
    %230 = vector.extract_strided_slice %222 {offsets = [0, 0], sizes = [16, 16], strides = [1, 1]} : vector<16x32xf32> to vector<16x16xf32>
    %231 = vector.shape_cast %230 : vector<16x16xf32> to vector<2x8x16xf32>
    %232 = arith.truncf %231 : vector<2x8x16xf32> to vector<2x8x16xbf16>
    "tpu.trace_start"() <{level = 10 : i32, message = "bqd,bkd->bqk"}> : () -> ()
    %cst_57 = arith.constant dense<0.000000e+00> : vector<2x8x8xf32>
    %233 = tpu.matmul %226, %229, %cst_57 {dimension_numbers = #tpu.dot_dimension_numbers<[2], [2], [1], [1], [0, 0, 0, 1, 1, 1], [0], [0]>} : vector<2x8x16xbf16>, vector<2x8x16xbf16>, vector<2x8x8xf32> -> vector<2x8x8xf32>
    "tpu.trace_stop"() : () -> ()
    %cst_58 = arith.constant 2.500000e-01 : f32
    %234 = vector.broadcast %cst_58 : f32 to vector<2x8x8xf32>
    %235 = arith.mulf %233, %234 : vector<2x8x8xf32>
    %236 = vector.broadcast %31 : vector<2x1x8xf32> to vector<2x8x8xf32>
    %237 = arith.addf %235, %236 : vector<2x8x8xf32>
    %cst_59 = arith.constant dense<0xFF800000> : vector<2x8xf32>
    %238 = vector.multi_reduction <maximumf>, %237, %cst_59 [2] : vector<2x8x8xf32> to vector<2x8xf32>
    %239 = vector.shape_cast %238 : vector<2x8xf32> to vector<2x8x1xf32>
    %240 = vector.broadcast %239 : vector<2x8x1xf32> to vector<2x8x8xf32>
    %241 = arith.subf %237, %240 : vector<2x8x8xf32>
    %242 = math.exp %241 : vector<2x8x8xf32>
    %cst_60 = arith.constant dense<0.000000e+00> : vector<2x8xf32>
    %243 = vector.multi_reduction <add>, %242, %cst_60 [2] : vector<2x8x8xf32> to vector<2x8xf32>
    %244 = vector.shape_cast %243 : vector<2x8xf32> to vector<2x8x1xf32>
    %245 = tpu.reciprocal %244 {approx = true} : vector<2x8x1xf32> -> vector<2x8x1xf32>
    %246 = vector.broadcast %245 : vector<2x8x1xf32> to vector<2x8x8xf32>
    %247 = arith.mulf %242, %246 : vector<2x8x8xf32>
    %248 = arith.truncf %247 : vector<2x8x8xf32> to vector<2x8x8xbf16>
    "tpu.trace_start"() <{level = 10 : i32, message = "bqk,bkd->bqd"}> : () -> ()
    %cst_61 = arith.constant dense<0.000000e+00> : vector<2x8x16xf32>
    %249 = tpu.matmul %248, %232, %cst_61 {dimension_numbers = #tpu.dot_dimension_numbers<[2], [1], [1], [2], [0, 0, 0, 1, 1, 2], [0], [0]>} : vector<2x8x8xbf16>, vector<2x8x16xbf16>, vector<2x8x16xf32> -> vector<2x8x16xf32>
    "tpu.trace_stop"() : () -> ()
    %250 = vector.shape_cast %249 : vector<2x8x16xf32> to vector<16x16xf32>
    %251 = arith.truncf %250 : vector<16x16xf32> to vector<16x16xbf16>
    %252 = vector.extract_strided_slice %204 {offsets = [0, 0], sizes = [16, 32], strides = [1, 1]} : vector<32x32xbf16> to vector<16x32xbf16>
    %cst_62 = arith.constant dense<0.000000e+00> : vector<16x32xf32>
    %253 = tpu.matmul %251, %252, %cst_62 {dimension_numbers = #tpu.dot_dimension_numbers<[1], [0], [0], [1], [0, 0, 1, 1], [], []>} : vector<16x16xbf16>, vector<16x32xbf16>, vector<16x32xf32> -> vector<16x32xf32>
    %254 = arith.addf %223, %253 : vector<16x32xf32>
    %255 = vector.extract_strided_slice %214 {offsets = [0, 16], sizes = [16, 16], strides = [1, 1]} : vector<16x32xf32> to vector<16x16xf32>
    %256 = vector.shape_cast %255 : vector<16x16xf32> to vector<2x8x16xf32>
    %257 = arith.truncf %256 : vector<2x8x16xf32> to vector<2x8x16xbf16>
    %258 = vector.extract_strided_slice %218 {offsets = [0, 16], sizes = [16, 16], strides = [1, 1]} : vector<16x32xf32> to vector<16x16xf32>
    %259 = vector.shape_cast %258 : vector<16x16xf32> to vector<2x8x16xf32>
    %260 = arith.truncf %259 : vector<2x8x16xf32> to vector<2x8x16xbf16>
    %261 = vector.extract_strided_slice %222 {offsets = [0, 16], sizes = [16, 16], strides = [1, 1]} : vector<16x32xf32> to vector<16x16xf32>
    %262 = vector.shape_cast %261 : vector<16x16xf32> to vector<2x8x16xf32>
    %263 = arith.truncf %262 : vector<2x8x16xf32> to vector<2x8x16xbf16>
    "tpu.trace_start"() <{level = 10 : i32, message = "bqd,bkd->bqk"}> : () -> ()
    %cst_63 = arith.constant dense<0.000000e+00> : vector<2x8x8xf32>
    %264 = tpu.matmul %257, %260, %cst_63 {dimension_numbers = #tpu.dot_dimension_numbers<[2], [2], [1], [1], [0, 0, 0, 1, 1, 1], [0], [0]>} : vector<2x8x16xbf16>, vector<2x8x16xbf16>, vector<2x8x8xf32> -> vector<2x8x8xf32>
    "tpu.trace_stop"() : () -> ()
    %cst_64 = arith.constant 2.500000e-01 : f32
    %265 = vector.broadcast %cst_64 : f32 to vector<2x8x8xf32>
    %266 = arith.mulf %264, %265 : vector<2x8x8xf32>
    %267 = vector.broadcast %31 : vector<2x1x8xf32> to vector<2x8x8xf32>
    %268 = arith.addf %266, %267 : vector<2x8x8xf32>
    %cst_65 = arith.constant dense<0xFF800000> : vector<2x8xf32>
    %269 = vector.multi_reduction <maximumf>, %268, %cst_65 [2] : vector<2x8x8xf32> to vector<2x8xf32>
    %270 = vector.shape_cast %269 : vector<2x8xf32> to vector<2x8x1xf32>
    %271 = vector.broadcast %270 : vector<2x8x1xf32> to vector<2x8x8xf32>
    %272 = arith.subf %268, %271 : vector<2x8x8xf32>
    %273 = math.exp %272 : vector<2x8x8xf32>
    %cst_66 = arith.constant dense<0.000000e+00> : vector<2x8xf32>
    %274 = vector.multi_reduction <add>, %273, %cst_66 [2] : vector<2x8x8xf32> to vector<2x8xf32>
    %275 = vector.shape_cast %274 : vector<2x8xf32> to vector<2x8x1xf32>
    %276 = tpu.reciprocal %275 {approx = true} : vector<2x8x1xf32> -> vector<2x8x1xf32>
    %277 = vector.broadcast %276 : vector<2x8x1xf32> to vector<2x8x8xf32>
    %278 = arith.mulf %273, %277 : vector<2x8x8xf32>
    %279 = arith.truncf %278 : vector<2x8x8xf32> to vector<2x8x8xbf16>
    "tpu.trace_start"() <{level = 10 : i32, message = "bqk,bkd->bqd"}> : () -> ()
    %cst_67 = arith.constant dense<0.000000e+00> : vector<2x8x16xf32>
    %280 = tpu.matmul %279, %263, %cst_67 {dimension_numbers = #tpu.dot_dimension_numbers<[2], [1], [1], [2], [0, 0, 0, 1, 1, 2], [0], [0]>} : vector<2x8x8xbf16>, vector<2x8x16xbf16>, vector<2x8x16xf32> -> vector<2x8x16xf32>
    "tpu.trace_stop"() : () -> ()
    %281 = vector.shape_cast %280 : vector<2x8x16xf32> to vector<16x16xf32>
    %282 = arith.truncf %281 : vector<16x16xf32> to vector<16x16xbf16>
    %283 = vector.extract_strided_slice %204 {offsets = [16, 0], sizes = [16, 32], strides = [1, 1]} : vector<32x32xbf16> to vector<16x32xbf16>
    %cst_68 = arith.constant dense<0.000000e+00> : vector<16x32xf32>
    %284 = tpu.matmul %282, %283, %cst_68 {dimension_numbers = #tpu.dot_dimension_numbers<[1], [0], [0], [1], [0, 0, 1, 1], [], []>} : vector<16x16xbf16>, vector<16x32xbf16>, vector<16x32xf32> -> vector<16x32xf32>
    %285 = arith.addf %254, %284 : vector<16x32xf32>
    %286 = vector.extract_strided_slice %200 {offsets = [3, 0], sizes = [1, 32], strides = [1, 1]} : vector<10x32xf32> to vector<1x32xf32>
    %287 = vector.broadcast %286 : vector<1x32xf32> to vector<16x32xf32>
    %288 = arith.addf %285, %287 : vector<16x32xf32>
    %289 = arith.addf %196, %288 : vector<16x32xf32>
    %290 = vector.extract_strided_slice %200 {offsets = [4, 0], sizes = [1, 32], strides = [1, 1]} : vector<10x32xf32> to vector<1x32xf32>
    %291 = vector.extract_strided_slice %200 {offsets = [5, 0], sizes = [1, 32], strides = [1, 1]} : vector<10x32xf32> to vector<1x32xf32>
    %cst_69 = arith.constant dense<0.000000e+00> : vector<16xf32>
    %292 = vector.multi_reduction <add>, %289, %cst_69 [1] : vector<16x32xf32> to vector<16xf32>
    %293 = vector.shape_cast %292 : vector<16xf32> to vector<16x1xf32>
    %cst_70 = arith.constant 3.200000e+01 : f32
    %294 = vector.broadcast %cst_70 : f32 to vector<16x1xf32>
    %295 = arith.divf %293, %294 : vector<16x1xf32>
    %296 = vector.broadcast %295 : vector<16x1xf32> to vector<16x32xf32>
    %297 = arith.subf %289, %296 : vector<16x32xf32>
    %298 = arith.mulf %297, %297 : vector<16x32xf32>
    %cst_71 = arith.constant dense<0.000000e+00> : vector<16xf32>
    %299 = vector.multi_reduction <add>, %298, %cst_71 [1] : vector<16x32xf32> to vector<16xf32>
    %300 = vector.shape_cast %299 : vector<16xf32> to vector<16x1xf32>
    %cst_72 = arith.constant 3.200000e+01 : f32
    %301 = vector.broadcast %cst_72 : f32 to vector<16x1xf32>
    %302 = arith.divf %300, %301 : vector<16x1xf32>
    %303 = vector.broadcast %295 : vector<16x1xf32> to vector<16x32xf32>
    %304 = arith.subf %289, %303 : vector<16x32xf32>
    %cst_73 = arith.constant 9.99999996E-13 : f32
    %305 = vector.broadcast %cst_73 : f32 to vector<16x1xf32>
    %306 = arith.addf %302, %305 : vector<16x1xf32>
    %307 = math.rsqrt %306 : vector<16x1xf32>
    %308 = vector.broadcast %307 : vector<16x1xf32> to vector<16x32xf32>
    %309 = arith.mulf %304, %308 : vector<16x32xf32>
    %310 = vector.broadcast %290 : vector<1x32xf32> to vector<16x32xf32>
    %311 = arith.mulf %309, %310 : vector<16x32xf32>
    %312 = vector.broadcast %291 : vector<1x32xf32> to vector<16x32xf32>
    %313 = arith.addf %311, %312 : vector<16x32xf32>
    %314 = arith.truncf %313 : vector<16x32xf32> to vector<16x32xbf16>
    %cst_74 = arith.constant dense<0.000000e+00> : vector<16x32xf32>
    %315 = tpu.matmul %314, %206, %cst_74 {dimension_numbers = #tpu.dot_dimension_numbers<[1], [0], [0], [1], [0, 0, 1, 1], [], []>} : vector<16x32xbf16>, vector<32x32xbf16>, vector<16x32xf32> -> vector<16x32xf32>
    %316 = vector.extract_strided_slice %200 {offsets = [6, 0], sizes = [1, 32], strides = [1, 1]} : vector<10x32xf32> to vector<1x32xf32>
    %317 = vector.broadcast %316 : vector<1x32xf32> to vector<16x32xf32>
    %318 = arith.addf %315, %317 : vector<16x32xf32>
    %cst_75 = arith.constant 5.000000e-01 : f32
    %319 = vector.broadcast %cst_75 : f32 to vector<16x32xf32>
    %320 = arith.mulf %319, %318 : vector<16x32xf32>
    %cst_76 = arith.constant 4.471500e-02 : f32
    %321 = vector.broadcast %cst_76 : f32 to vector<16x32xf32>
    %322 = arith.mulf %321, %318 : vector<16x32xf32>
    %323 = arith.mulf %322, %318 : vector<16x32xf32>
    %324 = arith.mulf %323, %318 : vector<16x32xf32>
    %325 = arith.addf %318, %324 : vector<16x32xf32>
    %cst_77 = arith.constant 0.797884583 : f32
    %326 = vector.broadcast %cst_77 : f32 to vector<16x32xf32>
    %327 = arith.mulf %326, %325 : vector<16x32xf32>
    %328 = math.tanh %327 : vector<16x32xf32>
    %cst_78 = arith.constant 1.000000e+00 : f32
    %329 = vector.broadcast %cst_78 : f32 to vector<16x32xf32>
    %330 = arith.addf %329, %328 : vector<16x32xf32>
    %331 = arith.mulf %320, %330 : vector<16x32xf32>
    %332 = arith.truncf %331 : vector<16x32xf32> to vector<16x32xbf16>
    %cst_79 = arith.constant dense<0.000000e+00> : vector<16x32xf32>
    %333 = tpu.matmul %332, %208, %cst_79 {dimension_numbers = #tpu.dot_dimension_numbers<[1], [0], [0], [1], [0, 0, 1, 1], [], []>} : vector<16x32xbf16>, vector<32x32xbf16>, vector<16x32xf32> -> vector<16x32xf32>
    %334 = vector.extract_strided_slice %200 {offsets = [7, 0], sizes = [1, 32], strides = [1, 1]} : vector<10x32xf32> to vector<1x32xf32>
    %335 = vector.broadcast %334 : vector<1x32xf32> to vector<16x32xf32>
    %336 = arith.addf %333, %335 : vector<16x32xf32>
    %337 = arith.addf %313, %336 : vector<16x32xf32>
    %338 = vector.extract_strided_slice %200 {offsets = [8, 0], sizes = [1, 32], strides = [1, 1]} : vector<10x32xf32> to vector<1x32xf32>
    %339 = vector.extract_strided_slice %200 {offsets = [9, 0], sizes = [1, 32], strides = [1, 1]} : vector<10x32xf32> to vector<1x32xf32>
    %cst_80 = arith.constant dense<0.000000e+00> : vector<16xf32>
    %340 = vector.multi_reduction <add>, %337, %cst_80 [1] : vector<16x32xf32> to vector<16xf32>
    %341 = vector.shape_cast %340 : vector<16xf32> to vector<16x1xf32>
    %cst_81 = arith.constant 3.200000e+01 : f32
    %342 = vector.broadcast %cst_81 : f32 to vector<16x1xf32>
    %343 = arith.divf %341, %342 : vector<16x1xf32>
    %344 = vector.broadcast %343 : vector<16x1xf32> to vector<16x32xf32>
    %345 = arith.subf %337, %344 : vector<16x32xf32>
    %346 = arith.mulf %345, %345 : vector<16x32xf32>
    %cst_82 = arith.constant dense<0.000000e+00> : vector<16xf32>
    %347 = vector.multi_reduction <add>, %346, %cst_82 [1] : vector<16x32xf32> to vector<16xf32>
    %348 = vector.shape_cast %347 : vector<16xf32> to vector<16x1xf32>
    %cst_83 = arith.constant 3.200000e+01 : f32
    %349 = vector.broadcast %cst_83 : f32 to vector<16x1xf32>
    %350 = arith.divf %348, %349 : vector<16x1xf32>
    %351 = vector.broadcast %343 : vector<16x1xf32> to vector<16x32xf32>
    %352 = arith.subf %337, %351 : vector<16x32xf32>
    %cst_84 = arith.constant 9.99999996E-13 : f32
    %353 = vector.broadcast %cst_84 : f32 to vector<16x1xf32>
    %354 = arith.addf %350, %353 : vector<16x1xf32>
    %355 = math.rsqrt %354 : vector<16x1xf32>
    %356 = vector.broadcast %355 : vector<16x1xf32> to vector<16x32xf32>
    %357 = arith.mulf %352, %356 : vector<16x32xf32>
    %358 = vector.broadcast %338 : vector<1x32xf32> to vector<16x32xf32>
    %359 = arith.mulf %357, %358 : vector<16x32xf32>
    %360 = vector.broadcast %339 : vector<1x32xf32> to vector<16x32xf32>
    %361 = arith.addf %359, %360 : vector<16x32xf32>
    %362 = vector.shape_cast %361 : vector<16x32xf32> to vector<2x8x32xf32>
    %363 = vector.extract_strided_slice %362 {offsets = [0, 0, 0], sizes = [2, 1, 32], strides = [1, 1, 1]} : vector<2x8x32xf32> to vector<2x1x32xf32>
    %364 = vector.shape_cast %363 : vector<2x1x32xf32> to vector<2x32xf32>
    %c2 = arith.constant 2 : index
    %c0_85 = arith.constant 0 : index
    %365 = vector.load %arg2[%c2, %c0_85] : memref<4x32xf32, #tpu.memory_space<vmem>>, vector<1x32xf32>
    %366 = vector.broadcast %365 : vector<1x32xf32> to vector<2x32xf32>
    %367 = arith.mulf %364, %366 : vector<2x32xf32>
    %cst_86 = arith.constant dense<0.000000e+00> : vector<2xf32>
    %368 = vector.multi_reduction <add>, %367, %cst_86 [1] : vector<2x32xf32> to vector<2xf32>
    %369 = vector.shape_cast %368 : vector<2xf32> to vector<2x1xf32>
    %c3 = arith.constant 3 : index
    %c0_87 = arith.constant 0 : index
    %370 = vector.load %arg2[%c3, %c0_87] : memref<4x32xf32, #tpu.memory_space<vmem>>, vector<1x1xf32>
    %371 = vector.broadcast %370 : vector<1x1xf32> to vector<2x1xf32>
    %372 = arith.addf %369, %371 : vector<2x1xf32>
    %373 = arith.negf %372 : vector<2x1xf32>
    %374 = math.exp %373 : vector<2x1xf32>
    %cst_88 = arith.constant 1.000000e+00 : f32
    %375 = vector.broadcast %cst_88 : f32 to vector<2x1xf32>
    %376 = arith.addf %375, %374 : vector<2x1xf32>
    %377 = arith.divf %375, %376 : vector<2x1xf32>
    %c0_89 = arith.constant 0 : index
    %c0_90 = arith.constant 0 : index
    %378 = vector.load %arg5[%c0_89, %c0_90] : memref<2x1xf32, #tpu.memory_space<vmem>>, vector<2x1xf32>
    tpu.vector_store %arg5[%c0_89, %c0_90], %377 {strides = array<i32>} : memref<2x1xf32, #tpu.memory_space<vmem>>, vector<2x1xf32>,
    return
  }
}

</mosaic_0001>

<llo_original>
// kernel: transformer_voter_forward.1
$region0: #{transformer_voter_forward.1}
  #allocation0 [shape = 'u32[]', space=smem, size = 0x4, offset = 0x4, fixed_abs, tag = 'smem constant byte address 0x4 - core index']
  #allocation1 [shape = 'u32[144,128]{1,0:T(1,128)}', space=vmem, size = 0x12000, scoped, tag = 'internal scratch']
  %s0 = inlined_call_operand.vmem [shape: f32[2,8,32], index: 0, kind: input, shape index: {}]
  %s1 = inlined_call_operand.vmem [shape: f32[2,8], index: 1, kind: input, shape index: {}]
  %s2 = inlined_call_operand.vmem [shape: f32[4,32], index: 2, kind: input, shape index: {}]
  %s3 = inlined_call_operand.vmem [shape: f32[2,32,192], index: 3, kind: input, shape index: {}]
  %s4 = inlined_call_operand.vmem [shape: f32[2,10,32], index: 4, kind: input, shape index: {}]
  %s5 = inlined_call_operand.vmem [shape: f32[2,1], index: 5, kind: output, shape index: {}]
  %s6 = sld [smem:[#allocation0]]
  $region30: #{transformer_voter_forward.1} parent=0
    _
  %s8 = ssub.s32 1, %s6
  %s9 = scalar_select 0, %s8, %s6
  // Predicated region
  $region2: #{transformer_voter_forward.1} parent=0 // pred_check
    _
  $region3: #{transformer_voter_forward.1} parent=0 // pred_check_branch
    %11 = sbr.rel (0) target = $region5
  $region4: #{transformer_voter_forward.1} parent=0 // pred_region
    _
  $region5: #{transformer_voter_forward.1} parent=0 // pred_fallthru
    _
  // Predicated region
  $region6: #{transformer_voter_forward.1} parent=0 // pred_check
    _
  $region7: #{transformer_voter_forward.1} parent=0 // pred_check_branch
    %13 = sbr.rel (0) target = $region9
  $region8: #{transformer_voter_forward.1} parent=0 // pred_region
    _
  $region9: #{transformer_voter_forward.1} parent=0 // pred_fallthru
    _
  // Predicated region
  $region10: #{transformer_voter_forward.1} parent=0 // pred_check
    _
  $region11: #{transformer_voter_forward.1} parent=0 // pred_check_branch
    %15 = sbr.rel (0) target = $region13
  $region12: #{transformer_voter_forward.1} parent=0 // pred_region
    _
  $region13: #{transformer_voter_forward.1} parent=0 // pred_fallthru
    _
  // Predicated region
  $region14: #{transformer_voter_forward.1} parent=0 // pred_check
    _
  $region15: #{transformer_voter_forward.1} parent=0 // pred_check_branch
    %17 = sbr.rel (0) target = $region17
  $region16: #{transformer_voter_forward.1} parent=0 // pred_region
    _
  $region17: #{transformer_voter_forward.1} parent=0 // pred_fallthru
    _
  // Predicated region
  $region18: #{transformer_voter_forward.1} parent=0 // pred_check
    _
  $region19: #{transformer_voter_forward.1} parent=0 // pred_check_branch
    %19 = sbr.rel (0) target = $region21
  $region20: #{transformer_voter_forward.1} parent=0 // pred_region
    _
  $region21: #{transformer_voter_forward.1} parent=0 // pred_fallthru
    _
  %v21 = vld [vmem:[%s0] sm:$0xff]
  %v22 = vld [vmem:[%s0 + $0x8] sm:$0xff]
  %v23 = vld [vmem:[%s2] sm:$0x1]
  %v24 = vld [vmem:[%s2 + $0x1] sm:$0x1]
  %vm25 = vcmask 261120
  %v26 = vsel %vm25, %v21, 0.0
  %27 = vadd.xlane.f32.xlu0 %v26
  %v28 = vpop.xlane.xlu0 %27
  %v29 = vsel %vm25, %v22, 0.0
  %30 = vadd.xlane.f32.xlu0 %v29
  %v31 = vpop.xlane.xlu0 %30
  %v32 = vrcp.pop 32.0
  %v33 = vmul.f32 %v28, %v32
  %v34 = vmul.f32 %v31, %v32
  %v35 = vsub.f32 %v21, %v33
  %v36 = vsub.f32 %v22, %v34
  %v37 = vmul.f32 %v35, %v35
  %v38 = vmul.f32 %v36, %v36
  %v39 = vsel %vm25, %v37, 0.0
  %40 = vadd.xlane.f32.xlu0 %v39
  %v41 = vpop.xlane.xlu0 %40
  %v42 = vsel %vm25, %v38, 0.0
  %43 = vadd.xlane.f32.xlu0 %v42
  %v44 = vpop.xlane.xlu0 %43
  %v45 = vmul.f32 %v41, %v32
  %v46 = vmul.f32 %v44, %v32
  %v47 = vadd.f32 %v45, 1e-12
  %v48 = vadd.f32 %v46, 1e-12
  %v49 = vrsqrt.pop %v47
  %v50 = vrsqrt.pop %v48
  %v51 = vmul.f32 %v35, %v49
  %v52 = vmul.f32 %v36, %v50
  %v53 = vlaneseq
  %v54 = vshrl.u32 %v53, 7
  %v55 = vsub.s32 0, %v54
  %v56 = vrot.slane %v23, %v55
  %v57 = vmul.f32 %v51, %v56
  %v58 = vmul.f32 %v52, %v56
  %v59 = vlaneseq
  %v60 = vshrl.u32 %v59, 7
  %v61 = vsub.s32 0, %v60
  %v62 = vrot.slane %v24, %v61
  %v63 = vadd.f32 %v57, %v62
  %v64 = vadd.f32 %v58, %v62
  %v65 = vld [vmem:[%s1] sm:$0x3]
  %v66 = vsub.f32 1.0, %v65
  %v67 = vmul.f32 %v66, -1e+09
  %v70 = vunpack.c.l.s4 1966171168
  %v71 = vunpack.c.0.s8 %v70
  %v72 = vlaneseq
  %v73 = vshrl.u32 %v72, 7
  %v74 = vsub.s32 %v71, %v73
  %v75 = vrot.slane %v67, %v74
  %v76 = vcombine.high %v75, %v75
  %v78 = vunpack.c.l.s4 1966171168
  %v79 = vunpack.c.0.s8 %v78
  %v80 = vlaneseq
  %v81 = vshrl.u32 %v80, 7
  %v82 = vsub.s32 %v79, %v81
  %v83 = vrot.slane %v75, %v82
  %v85 = vunpack.c.l.s4 1966171168
  %v86 = vunpack.c.0.s8 %v85
  %v87 = vlaneseq
  %v88 = vshrl.u32 %v87, 7
  %v89 = vsub.s32 %v86, %v88
  %v90 = vrot.slane %v76, %v89
  %v91 = vld [vmem:[%s3] sm:$0xff]
  %v92 = vld [vmem:[%s3 + $0x8] sm:$0xff]
  %v93 = vld [vmem:[%s3 + $0x10] sm:$0xff]
  %v94 = vld [vmem:[%s3 + $0x18] sm:$0xff]
  %v95 = vld [vmem:[%s3 + $0x20] sm:$0xff]
  %v96 = vld [vmem:[%s3 + $0x28] sm:$0xff]
  %v97 = vld [vmem:[%s3 + $0x30] sm:$0xff]
  %v98 = vld [vmem:[%s3 + $0x38] sm:$0xff]
  %v99 = vld [vmem:[%s4] sm:$0xff]
  %v100 = vld [vmem:[%s4 + $0x8] sm:$0x3]
  %v101 = vpack.c.bf16 %v93, %v91
  %v102 = vpack.c.bf16 %v97, %v95
  %v103 = vpack.c.bf16 %v94, %v92
  %v104 = vpack.c.bf16 %v98, %v96
  %v105 = vpack.c.bf16 %v64, %v63
  %v107 = vsel %vm25, %v105, 0
  %109 = vmatprep.subr.bf16.mxu0 0
  %110 = vmatpush1.bf16.msra.mxu0 %v101
  %111 = vmatprep.subr.bf16.mxu0 0
  %112 = vmatpush1.bf16.msra.mxu0 %v102
  %113 = vmatprep.subr.bf16.mxu0 0
  %114 = vmatpush1.bf16.msra.mxu0 0
  %115 = vmatprep.subr.bf16.mxu0 0
  %116 = vmatpush1.bf16.msra.mxu0 0
  %117 = vmatprep.subr.bf16.mxu0 0
  %118 = vmatpush1.bf16.msra.mxu0 0
  %119 = vmatprep.subr.bf16.mxu0 0
  %120 = vmatpush1.bf16.msra.mxu0 0
  %121 = vmatprep.subr.bf16.mxu0 0
  %122 = vmatpush1.bf16.msra.mxu0 0
  %123 = vmatprep.subr.bf16.mxu0 0
  %124 = vmatpush1.bf16.msra.mxu0 0
  %125 = vmatprep.subr.bf16.mxu0 0
  %126 = vmatpush1.bf16.msra.mxu0 0
  %127 = vmatprep.subr.bf16.mxu0 0
  %128 = vmatpush1.bf16.msra.mxu0 0
  %129 = vmatprep.subr.bf16.mxu0 0
  %130 = vmatpush1.bf16.msra.mxu0 0
  %131 = vmatprep.subr.bf16.mxu0 0
  %132 = vmatpush1.bf16.msra.mxu0 0
  %133 = vmatprep.subr.bf16.mxu0 0
  %134 = vmatpush1.bf16.msra.mxu0 0
  %135 = vmatprep.subr.bf16.mxu0 0
  %136 = vmatpush1.bf16.msra.mxu0 0
  %137 = vmatprep.subr.bf16.mxu0 0
  %138 = vmatpush1.bf16.msra.mxu0 0
  %139 = vmatprep.subr.bf16.mxu0 0
  %140 = vmatpush1.bf16.msra.mxu0 0
  %141 = vmatprep.mubr.bf16.mxu0 0
  %142 = vmatmul.mubr.bf16.gmra.mrb[0].mxu0 %v107
  %v143 = vpop.f32.mrb[0].mxu0
  %v144 = vadd.f32 0.0, %v143
  %v145 = vpop.f32.mrb[0].mxu0
  %v146 = vpop.f32.mrb[0].mxu0
  %v147 = vadd.f32 0.0, %v146
  %v148 = vpop.f32.mrb[0].mxu0
  %149 = vdwg.mxu0
  %v150 = vlaneseq
  %v151 = vshrl.u32 %v150, 7
  %v152 = vsub.s32 0, %v151
  %v153 = vrot.slane %v99, %v152
  %v154 = vadd.f32 %v144, %v153
  %v155 = vadd.f32 %v147, %v153
  %v156 = vlaneseq
  %v157 = vshrl.u32 %v156, 7
  %v158 = vsub.s32 1, %v157
  %v159 = vrot.slane %v99, %v158
  %161 = vrot.lane.b32.xlu0 %v159, 32
  %v162 = vpop.permute.xlu0 %161
  %v164 = vadd.f32 %v144, %v162
  %v165 = vadd.f32 %v147, %v162
  %v166 = vlaneseq
  %v167 = vshrl.u32 %v166, 7
  %v168 = vsub.s32 2, %v167
  %v169 = vrot.slane %v99, %v168
  %171 = vrot.lane.b32.xlu0 %v169, 64
  %v172 = vpop.permute.xlu0 %171
  %v174 = vadd.f32 %v144, %v172
  %v175 = vadd.f32 %v147, %v172
  %v176 = vpack.c.bf16 %v154, %v154
  %v177 = vpack.c.bf16 %v155, %v155
  %v178 = vpack.c.bf16 %v164, %v164
  %v179 = vpack.c.bf16 %v165, %v165
  %v180 = vpack.c.bf16 %v174, %v174
  %v181 = vpack.c.bf16 %v175, %v175
  %183 = vrot.lane.b32.xlu0 %v178, 96
  %v184 = vpop.permute.xlu0 %183
  %vm185 = vcmask 130048
  %v187 = vsel %vm185, %v176, 0
  %v190 = vsel %vm185, %v184, 0
  %192 = vmatprep.subr.bf16.mxu0 0
  %193 = vmatpush1.bf16.xpose.msra.mxu0 %v190
  %194 = vmatprep.subr.bf16.mxu0 0
  %195 = vmatpush1.bf16.xpose.msra.mxu0 0
  %196 = vmatprep.subr.bf16.mxu0 0
  %197 = vmatpush1.bf16.xpose.msra.mxu0 0
  %198 = vmatprep.subr.bf16.mxu0 0
  %199 = vmatpush1.bf16.xpose.msra.mxu0 0
  %200 = vmatprep.subr.bf16.mxu0 0
  %201 = vmatpush1.bf16.xpose.msra.mxu0 0
  %202 = vmatprep.subr.bf16.mxu0 0
  %203 = vmatpush1.bf16.xpose.msra.mxu0 0
  %204 = vmatprep.subr.bf16.mxu0 0
  %205 = vmatpush1.bf16.xpose.msra.mxu0 0
  %206 = vmatprep.subr.bf16.mxu0 0
  %207 = vmatpush1.bf16.xpose.msra.mxu0 0
  %208 = vmatprep.subr.bf16.mxu0 0
  %209 = vmatpush1.bf16.xpose.msra.mxu0 0
  %210 = vmatprep.subr.bf16.mxu0 0
  %211 = vmatpush1.bf16.xpose.msra.mxu0 0
  %212 = vmatprep.subr.bf16.mxu0 0
  %213 = vmatpush1.bf16.xpose.msra.mxu0 0
  %214 = vmatprep.subr.bf16.mxu0 0
  %215 = vmatpush1.bf16.xpose.msra.mxu0 0
  %216 = vmatprep.subr.bf16.mxu0 0
  %217 = vmatpush1.bf16.xpose.msra.mxu0 0
  %218 = vmatprep.subr.bf16.mxu0 0
  %219 = vmatpush1.bf16.xpose.msra.mxu0 0
  %220 = vmatprep.subr.bf16.mxu0 0
  %221 = vmatpush1.bf16.xpose.msra.mxu0 0
  %222 = vmatprep.subr.bf16.mxu0 0
  %223 = vmatpush1.bf16.xpose.msra.mxu0 0
  %224 = vmatprep.mubr.bf16.mxu0 0
  %225 = vmatmul.mubr.bf16.gmra.mrb[0].mxu0 %v187
  %v226 = vpop.f32.mrb[0].mxu0
  %v227 = vadd.f32 0.0, %v226
  %v228 = vpop.f32.mrb[0].mxu0
  %v229 = vpop.f32.mrb[0].mxu0
  %v230 = vpop.f32.mrb[0].mxu0
  %231 = vdwg.mxu0
  %233 = vrot.lane.b32.xlu0 %v179, 96
  %v234 = vpop.permute.xlu0 %233
  %v236 = vsel %vm185, %v177, 0
  %v239 = vsel %vm185, %v234, 0
  %241 = vmatprep.subr.bf16.mxu0 0
  %242 = vmatpush1.bf16.xpose.msra.mxu0 %v239
  %243 = vmatprep.subr.bf16.mxu0 0
  %244 = vmatpush1.bf16.xpose.msra.mxu0 0
  %245 = vmatprep.subr.bf16.mxu0 0
  %246 = vmatpush1.bf16.xpose.msra.mxu0 0
  %247 = vmatprep.subr.bf16.mxu0 0
  %248 = vmatpush1.bf16.xpose.msra.mxu0 0
  %249 = vmatprep.subr.bf16.mxu0 0
  %250 = vmatpush1.bf16.xpose.msra.mxu0 0
  %251 = vmatprep.subr.bf16.mxu0 0
  %252 = vmatpush1.bf16.xpose.msra.mxu0 0
  %253 = vmatprep.subr.bf16.mxu0 0
  %254 = vmatpush1.bf16.xpose.msra.mxu0 0
  %255 = vmatprep.subr.bf16.mxu0 0
  %256 = vmatpush1.bf16.xpose.msra.mxu0 0
  %257 = vmatprep.subr.bf16.mxu0 0
  %258 = vmatpush1.bf16.xpose.msra.mxu0 0
  %259 = vmatprep.subr.bf16.mxu0 0
  %260 = vmatpush1.bf16.xpose.msra.mxu0 0
  %261 = vmatprep.subr.bf16.mxu0 0
  %262 = vmatpush1.bf16.xpose.msra.mxu0 0
  %263 = vmatprep.subr.bf16.mxu0 0
  %264 = vmatpush1.bf16.xpose.msra.mxu0 0
  %265 = vmatprep.subr.bf16.mxu0 0
  %266 = vmatpush1.bf16.xpose.msra.mxu0 0
  %267 = vmatprep.subr.bf16.mxu0 0
  %268 = vmatpush1.bf16.xpose.msra.mxu0 0
  %269 = vmatprep.subr.bf16.mxu0 0
  %270 = vmatpush1.bf16.xpose.msra.mxu0 0
  %271 = vmatprep.subr.bf16.mxu0 0
  %272 = vmatpush1.bf16.xpose.msra.mxu0 0
  %273 = vmatprep.mubr.bf16.mxu0 0
  %274 = vmatmul.mubr.bf16.gmra.mrb[0].mxu0 %v236
  %v275 = vpop.f32.mrb[0].mxu0
  %v276 = vadd.f32 0.0, %v275
  %v277 = vpop.f32.mrb[0].mxu0
  %v278 = vpop.f32.mrb[0].mxu0
  %v279 = vpop.f32.mrb[0].mxu0
  %280 = vdwg.mxu0
  %v281 = vmul.f32 %v227, 0.25
  %v282 = vmul.f32 %v276, 0.25
  %v283 = vlaneseq
  %v284 = vshrl.u32 %v283, 7
  %v285 = vsub.s32 0, %v284
  %v286 = vrot.slane %v83, %v285
  %v287 = vlaneseq
  %v288 = vshrl.u32 %v287, 7
  %v289 = vsub.s32 0, %v288
  %v290 = vrot.slane %v90, %v289
  %v293 = vadd.f32 %v281, %v286
  %v294 = vadd.f32 %v282, %v290
  %vm295 = vcmask 64512
  %v296 = vsel %vm295, %v293, -inf
  %297 = vmax.xlane.f32.xlu0 %v296
  %v298 = vpop.xlane.xlu0 %297
  %v299 = vsel %vm295, %v294, -inf
  %300 = vmax.xlane.f32.xlu0 %v299
  %v301 = vpop.xlane.xlu0 %300
  %v302 = vsub.f32 %v293, %v298
  %v303 = vsub.f32 %v294, %v301
  %v304 = vmul.f32 %v302, 1.442695
  %v305 = vpow.pop %v304
  %v306 = vmul.f32 %v303, 1.442695
  %v307 = vpow.pop %v306
  %v308 = vsel %vm295, %v305, 0.0
  %309 = vadd.xlane.f32.xlu0 %v308
  %v310 = vpop.xlane.xlu0 %309
  %v311 = vsel %vm295, %v307, 0.0
  %312 = vadd.xlane.f32.xlu0 %v311
  %v313 = vpop.xlane.xlu0 %312
  %v314 = vrcp.pop %v310
  %v315 = vrcp.pop %v313
  %v316 = vmul.f32 %v305, %v314
  %v317 = vmul.f32 %v307, %v315
  %v318 = vpack.c.bf16 %v316, %v316
  %v319 = vpack.c.bf16 %v317, %v317
  %321 = vrot.lane.b32.xlu0 %v180, 64
  %v322 = vpop.permute.xlu0 %321
  %v324 = vsel %vm295, %v318, 0
  %vm326 = vcmask 1043456
  %v328 = vsel %vm326, %v322, 0
  %330 = vmatprep.subr.bf16.mxu0 0
  %331 = vmatpush1.bf16.msra.mxu0 %v328
  %332 = vmatprep.subr.bf16.mxu0 0
  %333 = vmatpush1.bf16.msra.mxu0 0
  %334 = vmatprep.subr.bf16.mxu0 0
  %335 = vmatpush1.bf16.msra.mxu0 0
  %336 = vmatprep.subr.bf16.mxu0 0
  %337 = vmatpush1.bf16.msra.mxu0 0
  %338 = vmatprep.subr.bf16.mxu0 0
  %339 = vmatpush1.bf16.msra.mxu0 0
  %340 = vmatprep.subr.bf16.mxu0 0
  %341 = vmatpush1.bf16.msra.mxu0 0
  %342 = vmatprep.subr.bf16.mxu0 0
  %343 = vmatpush1.bf16.msra.mxu0 0
  %344 = vmatprep.subr.bf16.mxu0 0
  %345 = vmatpush1.bf16.msra.mxu0 0
  %346 = vmatprep.subr.bf16.mxu0 0
  %347 = vmatpush1.bf16.msra.mxu0 0
  %348 = vmatprep.subr.bf16.mxu0 0
  %349 = vmatpush1.bf16.msra.mxu0 0
  %350 = vmatprep.subr.bf16.mxu0 0
  %351 = vmatpush1.bf16.msra.mxu0 0
  %352 = vmatprep.subr.bf16.mxu0 0
  %353 = vmatpush1.bf16.msra.mxu0 0
  %354 = vmatprep.subr.bf16.mxu0 0
  %355 = vmatpush1.bf16.msra.mxu0 0
  %356 = vmatprep.subr.bf16.mxu0 0
  %357 = vmatpush1.bf16.msra.mxu0 0
  %358 = vmatprep.subr.bf16.mxu0 0
  %359 = vmatpush1.bf16.msra.mxu0 0
  %360 = vmatprep.subr.bf16.mxu0 0
  %361 = vmatpush1.bf16.msra.mxu0 0
  %362 = vmatprep.mubr.bf16.mxu0 0
  %363 = vmatmul.mubr.bf16.gmra.mrb[0].mxu0 %v324
  %v364 = vpop.f32.mrb[0].mxu0
  %v365 = vadd.f32 0.0, %v364
  %v366 = vpop.f32.mrb[0].mxu0
  %v367 = vpop.f32.mrb[0].mxu0
  %v368 = vpop.f32.mrb[0].mxu0
  %369 = vdwg.mxu0
  %371 = vrot.lane.b32.xlu0 %v181, 64
  %v372 = vpop.permute.xlu0 %371
  %v374 = vsel %vm295, %v319, 0
  %v377 = vsel %vm326, %v372, 0
  %379 = vmatprep.subr.bf16.mxu0 0
  %380 = vmatpush1.bf16.msra.mxu0 %v377
  %381 = vmatprep.subr.bf16.mxu0 0
  %382 = vmatpush1.bf16.msra.mxu0 0
  %383 = vmatprep.subr.bf16.mxu0 0
  %384 = vmatpush1.bf16.msra.mxu0 0
  %385 = vmatprep.subr.bf16.mxu0 0
  %386 = vmatpush1.bf16.msra.mxu0 0
  %387 = vmatprep.subr.bf16.mxu0 0
  %388 = vmatpush1.bf16.msra.mxu0 0
  %389 = vmatprep.subr.bf16.mxu0 0
  %390 = vmatpush1.bf16.msra.mxu0 0
  %391 = vmatprep.subr.bf16.mxu0 0
  %392 = vmatpush1.bf16.msra.mxu0 0
  %393 = vmatprep.subr.bf16.mxu0 0
  %394 = vmatpush1.bf16.msra.mxu0 0
  %395 = vmatprep.subr.bf16.mxu0 0
  %396 = vmatpush1.bf16.msra.mxu0 0
  %397 = vmatprep.subr.bf16.mxu0 0
  %398 = vmatpush1.bf16.msra.mxu0 0
  %399 = vmatprep.subr.bf16.mxu0 0
  %400 = vmatpush1.bf16.msra.mxu0 0
  %401 = vmatprep.subr.bf16.mxu0 0
  %402 = vmatpush1.bf16.msra.mxu0 0
  %403 = vmatprep.subr.bf16.mxu0 0
  %404 = vmatpush1.bf16.msra.mxu0 0
  %405 = vmatprep.subr.bf16.mxu0 0
  %406 = vmatpush1.bf16.msra.mxu0 0
  %407 = vmatprep.subr.bf16.mxu0 0
  %408 = vmatpush1.bf16.msra.mxu0 0
  %409 = vmatprep.subr.bf16.mxu0 0
  %410 = vmatpush1.bf16.msra.mxu0 0
  %411 = vmatprep.mubr.bf16.mxu0 0
  %412 = vmatmul.mubr.bf16.gmra.mrb[0].mxu0 %v374
  %v413 = vpop.f32.mrb[0].mxu0
  %v414 = vadd.f32 0.0, %v413
  %v415 = vpop.f32.mrb[0].mxu0
  %v416 = vpop.f32.mrb[0].mxu0
  %v417 = vpop.f32.mrb[0].mxu0
  %418 = vdwg.mxu0
  %v419 = vpack.c.bf16 %v414, %v365
  %421 = vrot.lane.b32.xlu0 %v176, 112
  %v422 = vpop.permute.xlu0 %421
  %423 = vrot.lane.b32.xlu0 %v178, 80
  %v424 = vpop.permute.xlu0 %423
  %v426 = vsel %vm185, %v422, 0
  %v429 = vsel %vm185, %v424, 0
  %431 = vmatprep.subr.bf16.mxu0 0
  %432 = vmatpush1.bf16.xpose.msra.mxu0 %v429
  %433 = vmatprep.subr.bf16.mxu0 0
  %434 = vmatpush1.bf16.xpose.msra.mxu0 0
  %435 = vmatprep.subr.bf16.mxu0 0
  %436 = vmatpush1.bf16.xpose.msra.mxu0 0
  %437 = vmatprep.subr.bf16.mxu0 0
  %438 = vmatpush1.bf16.xpose.msra.mxu0 0
  %439 = vmatprep.subr.bf16.mxu0 0
  %440 = vmatpush1.bf16.xpose.msra.mxu0 0
  %441 = vmatprep.subr.bf16.mxu0 0
  %442 = vmatpush1.bf16.xpose.msra.mxu0 0
  %443 = vmatprep.subr.bf16.mxu0 0
  %444 = vmatpush1.bf16.xpose.msra.mxu0 0
  %445 = vmatprep.subr.bf16.mxu0 0
  %446 = vmatpush1.bf16.xpose.msra.mxu0 0
  %447 = vmatprep.subr.bf16.mxu0 0
  %448 = vmatpush1.bf16.xpose.msra.mxu0 0
  %449 = vmatprep.subr.bf16.mxu0 0
  %450 = vmatpush1.bf16.xpose.msra.mxu0 0
  %451 = vmatprep.subr.bf16.mxu0 0
  %452 = vmatpush1.bf16.xpose.msra.mxu0 0
  %453 = vmatprep.subr.bf16.mxu0 0
  %454 = vmatpush1.bf16.xpose.msra.mxu0 0
  %455 = vmatprep.subr.bf16.mxu0 0
  %456 = vmatpush1.bf16.xpose.msra.mxu0 0
  %457 = vmatprep.subr.bf16.mxu0 0
  %458 = vmatpush1.bf16.xpose.msra.mxu0 0
  %459 = vmatprep.subr.bf16.mxu0 0
  %460 = vmatpush1.bf16.xpose.msra.mxu0 0
  %461 = vmatprep.subr.bf16.mxu0 0
  %462 = vmatpush1.bf16.xpose.msra.mxu0 0
  %463 = vmatprep.mubr.bf16.mxu0 0
  %464 = vmatmul.mubr.bf16.gmra.mrb[0].mxu0 %v426
  %v465 = vpop.f32.mrb[0].mxu0
  %v466 = vadd.f32 0.0, %v465
  %v467 = vpop.f32.mrb[0].mxu0
  %v468 = vpop.f32.mrb[0].mxu0
  %v469 = vpop.f32.mrb[0].mxu0
  %470 = vdwg.mxu0
  %472 = vrot.lane.b32.xlu0 %v177, 112
  %v473 = vpop.permute.xlu0 %472
  %474 = vrot.lane.b32.xlu0 %v179, 80
  %v475 = vpop.permute.xlu0 %474
  %v477 = vsel %vm185, %v473, 0
  %v480 = vsel %vm185, %v475, 0
  %482 = vmatprep.subr.bf16.mxu0 0
  %483 = vmatpush1.bf16.xpose.msra.mxu0 %v480
  %484 = vmatprep.subr.bf16.mxu0 0
  %485 = vmatpush1.bf16.xpose.msra.mxu0 0
  %486 = vmatprep.subr.bf16.mxu0 0
  %487 = vmatpush1.bf16.xpose.msra.mxu0 0
  %488 = vmatprep.subr.bf16.mxu0 0
  %489 = vmatpush1.bf16.xpose.msra.mxu0 0
  %490 = vmatprep.subr.bf16.mxu0 0
  %491 = vmatpush1.bf16.xpose.msra.mxu0 0
  %492 = vmatprep.subr.bf16.mxu0 0
  %493 = vmatpush1.bf16.xpose.msra.mxu0 0
  %494 = vmatprep.subr.bf16.mxu0 0
  %495 = vmatpush1.bf16.xpose.msra.mxu0 0
  %496 = vmatprep.subr.bf16.mxu0 0
  %497 = vmatpush1.bf16.xpose.msra.mxu0 0
  %498 = vmatprep.subr.bf16.mxu0 0
  %499 = vmatpush1.bf16.xpose.msra.mxu0 0
  %500 = vmatprep.subr.bf16.mxu0 0
  %501 = vmatpush1.bf16.xpose.msra.mxu0 0
  %502 = vmatprep.subr.bf16.mxu0 0
  %503 = vmatpush1.bf16.xpose.msra.mxu0 0
  %504 = vmatprep.subr.bf16.mxu0 0
  %505 = vmatpush1.bf16.xpose.msra.mxu0 0
  %506 = vmatprep.subr.bf16.mxu0 0
  %507 = vmatpush1.bf16.xpose.msra.mxu0 0
  %508 = vmatprep.subr.bf16.mxu0 0
  %509 = vmatpush1.bf16.xpose.msra.mxu0 0
  %510 = vmatprep.subr.bf16.mxu0 0
  %511 = vmatpush1.bf16.xpose.msra.mxu0 0
  %512 = vmatprep.subr.bf16.mxu0 0
  %513 = vmatpush1.bf16.xpose.msra.mxu0 0
  %514 = vmatprep.mubr.bf16.mxu0 0
  %515 = vmatmul.mubr.bf16.gmra.mrb[0].mxu0 %v477
  %v516 = vpop.f32.mrb[0].mxu0
  %v517 = vadd.f32 0.0, %v516
  %v518 = vpop.f32.mrb[0].mxu0
  %v519 = vpop.f32.mrb[0].mxu0
  %v520 = vpop.f32.mrb[0].mxu0
  %521 = vdwg.mxu0
  %v522 = vmul.f32 %v466, 0.25
  %v523 = vmul.f32 %v517, 0.25
  %v524 = vadd.f32 %v522, %v286
  %v525 = vadd.f32 %v523, %v290
  %v526 = vsel %vm295, %v524, -inf
  %527 = vmax.xlane.f32.xlu0 %v526
  %v528 = vpop.xlane.xlu0 %527
  %v529 = vsel %vm295, %v525, -inf
  %530 = vmax.xlane.f32.xlu0 %v529
  %v531 = vpop.xlane.xlu0 %530
  %v532 = vsub.f32 %v524, %v528
  %v533 = vsub.f32 %v525, %v531
  %v534 = vmul.f32 %v532, 1.442695
  %v535 = vpow.pop %v534
  %v536 = vmul.f32 %v533, 1.442695
  %v537 = vpow.pop %v536
  %v538 = vsel %vm295, %v535, 0.0
  %539 = vadd.xlane.f32.xlu0 %v538
  %v540 = vpop.xlane.xlu0 %539
  %v541 = vsel %vm295, %v537, 0.0
  %542 = vadd.xlane.f32.xlu0 %v541
  %v543 = vpop.xlane.xlu0 %542
  %v544 = vrcp.pop %v540
  %v545 = vrcp.pop %v543
  %v546 = vmul.f32 %v535, %v544
  %v547 = vmul.f32 %v537, %v545
  %v548 = vpack.c.bf16 %v546, %v546
  %v549 = vpack.c.bf16 %v547, %v547
  %550 = vrot.lane.b32.xlu0 %v180, 48
  %v551 = vpop.permute.xlu0 %550
  %v553 = vsel %vm295, %v548, 0
  %v556 = vsel %vm326, %v551, 0
  %558 = vmatprep.subr.bf16.mxu0 0
  %559 = vmatpush1.bf16.msra.mxu0 %v556
  %560 = vmatprep.subr.bf16.mxu0 0
  %561 = vmatpush1.bf16.msra.mxu0 0
  %562 = vmatprep.subr.bf16.mxu0 0
  %563 = vmatpush1.bf16.msra.mxu0 0
  %564 = vmatprep.subr.bf16.mxu0 0
  %565 = vmatpush1.bf16.msra.mxu0 0
  %566 = vmatprep.subr.bf16.mxu0 0
  %567 = vmatpush1.bf16.msra.mxu0 0
  %568 = vmatprep.subr.bf16.mxu0 0
  %569 = vmatpush1.bf16.msra.mxu0 0
  %570 = vmatprep.subr.bf16.mxu0 0
  %571 = vmatpush1.bf16.msra.mxu0 0
  %572 = vmatprep.subr.bf16.mxu0 0
  %573 = vmatpush1.bf16.msra.mxu0 0
  %574 = vmatprep.subr.bf16.mxu0 0
  %575 = vmatpush1.bf16.msra.mxu0 0
  %576 = vmatprep.subr.bf16.mxu0 0
  %577 = vmatpush1.bf16.msra.mxu0 0
  %578 = vmatprep.subr.bf16.mxu0 0
  %579 = vmatpush1.bf16.msra.mxu0 0
  %580 = vmatprep.subr.bf16.mxu0 0
  %581 = vmatpush1.bf16.msra.mxu0 0
  %582 = vmatprep.subr.bf16.mxu0 0
  %583 = vmatpush1.bf16.msra.mxu0 0
  %584 = vmatprep.subr.bf16.mxu0 0
  %585 = vmatpush1.bf16.msra.mxu0 0
  %586 = vmatprep.subr.bf16.mxu0 0
  %587 = vmatpush1.bf16.msra.mxu0 0
  %588 = vmatprep.subr.bf16.mxu0 0
  %589 = vmatpush1.bf16.msra.mxu0 0
  %590 = vmatprep.mubr.bf16.mxu0 0
  %591 = vmatmul.mubr.bf16.gmra.mrb[0].mxu0 %v553
  %v592 = vpop.f32.mrb[0].mxu0
  %v593 = vadd.f32 0.0, %v592
  %v594 = vpop.f32.mrb[0].mxu0
  %v595 = vpop.f32.mrb[0].mxu0
  %v596 = vpop.f32.mrb[0].mxu0
  %597 = vdwg.mxu0
  %598 = vrot.lane.b32.xlu0 %v181, 48
  %v599 = vpop.permute.xlu0 %598
  %v601 = vsel %vm295, %v549, 0
  %v604 = vsel %vm326, %v599, 0
  %606 = vmatprep.subr.bf16.mxu0 0
  %607 = vmatpush1.bf16.msra.mxu0 %v604
  %608 = vmatprep.subr.bf16.mxu0 0
  %609 = vmatpush1.bf16.msra.mxu0 0
  %610 = vmatprep.subr.bf16.mxu0 0
  %611 = vmatpush1.bf16.msra.mxu0 0
  %612 = vmatprep.subr.bf16.mxu0 0
  %613 = vmatpush1.bf16.msra.mxu0 0
  %614 = vmatprep.subr.bf16.mxu0 0
  %615 = vmatpush1.bf16.msra.mxu0 0
  %616 = vmatprep.subr.bf16.mxu0 0
  %617 = vmatpush1.bf16.msra.mxu0 0
  %618 = vmatprep.subr.bf16.mxu0 0
  %619 = vmatpush1.bf16.msra.mxu0 0
  %620 = vmatprep.subr.bf16.mxu0 0
  %621 = vmatpush1.bf16.msra.mxu0 0
  %622 = vmatprep.subr.bf16.mxu0 0
  %623 = vmatpush1.bf16.msra.mxu0 0
  %624 = vmatprep.subr.bf16.mxu0 0
  %625 = vmatpush1.bf16.msra.mxu0 0
  %626 = vmatprep.subr.bf16.mxu0 0
  %627 = vmatpush1.bf16.msra.mxu0 0
  %628 = vmatprep.subr.bf16.mxu0 0
  %629 = vmatpush1.bf16.msra.mxu0 0
  %630 = vmatprep.subr.bf16.mxu0 0
  %631 = vmatpush1.bf16.msra.mxu0 0
  %632 = vmatprep.subr.bf16.mxu0 0
  %633 = vmatpush1.bf16.msra.mxu0 0
  %634 = vmatprep.subr.bf16.mxu0 0
  %635 = vmatpush1.bf16.msra.mxu0 0
  %636 = vmatprep.subr.bf16.mxu0 0
  %637 = vmatpush1.bf16.msra.mxu0 0
  %638 = vmatprep.mubr.bf16.mxu0 0
  %639 = vmatmul.mubr.bf16.gmra.mrb[0].mxu0 %v601
  %v640 = vpop.f32.mrb[0].mxu0
  %v641 = vadd.f32 0.0, %v640
  %v642 = vpop.f32.mrb[0].mxu0
  %v643 = vpop.f32.mrb[0].mxu0
  %v644 = vpop.f32.mrb[0].mxu0
  %645 = vdwg.mxu0
  %v646 = vpack.c.bf16 %v641, %v593
  %648 = vrot.lane.b32.xlu0 %v102, 32
  %v649 = vpop.permute.xlu0 %648
  %v652 = vsel %vm185, %v646, 0
  %654 = vmatprep.subr.bf16.mxu0 0
  %655 = vmatpush1.bf16.msra.mxu0 %v649
  %656 = vmatprep.subr.bf16.mxu0 0
  %657 = vmatpush1.bf16.msra.mxu0 0
  %658 = vmatprep.subr.bf16.mxu0 0
  %659 = vmatpush1.bf16.msra.mxu0 0
  %660 = vmatprep.subr.bf16.mxu0 0
  %661 = vmatpush1.bf16.msra.mxu0 0
  %662 = vmatprep.subr.bf16.mxu0 0
  %663 = vmatpush1.bf16.msra.mxu0 0
  %664 = vmatprep.subr.bf16.mxu0 0
  %665 = vmatpush1.bf16.msra.mxu0 0
  %666 = vmatprep.subr.bf16.mxu0 0
  %667 = vmatpush1.bf16.msra.mxu0 0
  %668 = vmatprep.subr.bf16.mxu0 0
  %669 = vmatpush1.bf16.msra.mxu0 0
  %670 = vmatprep.subr.bf16.mxu0 0
  %671 = vmatpush1.bf16.msra.mxu0 0
  %672 = vmatprep.subr.bf16.mxu0 0
  %673 = vmatpush1.bf16.msra.mxu0 0
  %674 = vmatprep.subr.bf16.mxu0 0
  %675 = vmatpush1.bf16.msra.mxu0 0
  %676 = vmatprep.subr.bf16.mxu0 0
  %677 = vmatpush1.bf16.msra.mxu0 0
  %678 = vmatprep.subr.bf16.mxu0 0
  %679 = vmatpush1.bf16.msra.mxu0 0
  %680 = vmatprep.subr.bf16.mxu0 0
  %681 = vmatpush1.bf16.msra.mxu0 0
  %682 = vmatprep.subr.bf16.mxu0 0
  %683 = vmatpush1.bf16.msra.mxu0 0
  %684 = vmatprep.subr.bf16.mxu0 0
  %685 = vmatpush1.bf16.msra.mxu0 0
  %686 = vmatprep.mubr.bf16.mxu0 0
  %687 = vmatmul.mubr.bf16.gmra.mrb[0].mxu0 %v652
  %v688 = vpop.f32.mrb[0].mxu0
  %v689 = vadd.f32 0.0, %v688
  %v690 = vpop.f32.mrb[0].mxu0
  %v691 = vpop.f32.mrb[0].mxu0
  %v692 = vadd.f32 0.0, %v691
  %v693 = vpop.f32.mrb[0].mxu0
  %694 = vdwg.mxu0
  %696 = vrot.lane.b32.xlu0 %v101, 32
  %v697 = vpop.permute.xlu0 %696
  %v700 = vsel %vm185, %v419, 0
  %702 = vmatprep.subr.bf16.mxu0 0
  %703 = vmatpush1.bf16.msra.mxu0 %v697
  %704 = vmatprep.subr.bf16.mxu0 0
  %705 = vmatpush1.bf16.msra.mxu0 0
  %706 = vmatprep.subr.bf16.mxu0 0
  %707 = vmatpush1.bf16.msra.mxu0 0
  %708 = vmatprep.subr.bf16.mxu0 0
  %709 = vmatpush1.bf16.msra.mxu0 0
  %710 = vmatprep.subr.bf16.mxu0 0
  %711 = vmatpush1.bf16.msra.mxu0 0
  %712 = vmatprep.subr.bf16.mxu0 0
  %713 = vmatpush1.bf16.msra.mxu0 0
  %714 = vmatprep.subr.bf16.mxu0 0
  %715 = vmatpush1.bf16.msra.mxu0 0
  %716 = vmatprep.subr.bf16.mxu0 0
  %717 = vmatpush1.bf16.msra.mxu0 0
  %718 = vmatprep.subr.bf16.mxu0 0
  %719 = vmatpush1.bf16.msra.mxu0 0
  %720 = vmatprep.subr.bf16.mxu0 0
  %721 = vmatpush1.bf16.msra.mxu0 0
  %722 = vmatprep.subr.bf16.mxu0 0
  %723 = vmatpush1.bf16.msra.mxu0 0
  %724 = vmatprep.subr.bf16.mxu0 0
  %725 = vmatpush1.bf16.msra.mxu0 0
  %726 = vmatprep.subr.bf16.mxu0 0
  %727 = vmatpush1.bf16.msra.mxu0 0
  %728 = vmatprep.subr.bf16.mxu0 0
  %729 = vmatpush1.bf16.msra.mxu0 0
  %730 = vmatprep.subr.bf16.mxu0 0
  %731 = vmatpush1.bf16.msra.mxu0 0
  %732 = vmatprep.subr.bf16.mxu0 0
  %733 = vmatpush1.bf16.msra.mxu0 0
  %734 = vmatprep.mubr.bf16.mxu0 0
  %735 = vmatmul.mubr.bf16.gmra.mrb[0].mxu0 %v700
  %v736 = vpop.f32.mrb[0].mxu0
  %v737 = vadd.f32 %v689, %v736
  %v738 = vpop.f32.mrb[0].mxu0
  %v739 = vpop.f32.mrb[0].mxu0
  %v740 = vadd.f32 %v692, %v739
  %v741 = vpop.f32.mrb[0].mxu0
  %742 = vdwg.mxu0
  %v743 = vlaneseq
  %v744 = vshrl.u32 %v743, 7
  %v745 = vsub.s32 3, %v744
  %v746 = vrot.slane %v99, %v745
  %v747 = vadd.f32 %v737, %v746
  %v748 = vadd.f32 %v740, %v746
  %v749 = vadd.f32 %v63, %v747
  %v750 = vadd.f32 %v64, %v748
  %v751 = vsel %vm25, %v749, 0.0
  %752 = vadd.xlane.f32.xlu0 %v751
  %v753 = vpop.xlane.xlu0 %752
  %v754 = vsel %vm25, %v750, 0.0
  %755 = vadd.xlane.f32.xlu0 %v754
  %v756 = vpop.xlane.xlu0 %755
  %v757 = vmul.f32 %v753, %v32
  %v758 = vmul.f32 %v756, %v32
  %v759 = vsub.f32 %v749, %v757
  %v760 = vsub.f32 %v750, %v758
  %v761 = vmul.f32 %v759, %v759
  %v762 = vmul.f32 %v760, %v760
  %v763 = vsel %vm25, %v761, 0.0
  %764 = vadd.xlane.f32.xlu0 %v763
  %v765 = vpop.xlane.xlu0 %764
  %v766 = vsel %vm25, %v762, 0.0
  %767 = vadd.xlane.f32.xlu0 %v766
  %v768 = vpop.xlane.xlu0 %767
  %v769 = vmul.f32 %v765, %v32
  %v770 = vmul.f32 %v768, %v32
  %v771 = vadd.f32 %v769, 1e-12
  %v772 = vadd.f32 %v770, 1e-12
  %v773 = vrsqrt.pop %v771
  %v774 = vrsqrt.pop %v772
  %v775 = vmul.f32 %v759, %v773
  %v776 = vmul.f32 %v760, %v774
  %v777 = vlaneseq
  %v778 = vshrl.u32 %v777, 7
  %v779 = vsub.s32 4, %v778
  %v780 = vrot.slane %v99, %v779
  %v781 = vmul.f32 %v775, %v780
  %v782 = vmul.f32 %v776, %v780
  %v783 = vlaneseq
  %v784 = vshrl.u32 %v783, 7
  %v785 = vsub.s32 5, %v784
  %v786 = vrot.slane %v99, %v785
  %v787 = vadd.f32 %v781, %v786
  %v788 = vadd.f32 %v782, %v786
  %v789 = vpack.c.bf16 %v788, %v787
  %v790 = vlaneseq
  %v791 = vshrl.u32 %v790, 7
  %v792 = vsub.s32 6, %v791
  %v793 = vrot.slane %v99, %v792
  %v795 = vsel %vm25, %v789, 0
  %797 = vmatprep.subr.bf16.mxu0 0
  %798 = vmatpush1.bf16.msra.mxu0 %v103
  %799 = vmatprep.subr.bf16.mxu0 0
  %800 = vmatpush1.bf16.msra.mxu0 %v104
  %801 = vmatprep.subr.bf16.mxu0 0
  %802 = vmatpush1.bf16.msra.mxu0 0
  %803 = vmatprep.subr.bf16.mxu0 0
  %804 = vmatpush1.bf16.msra.mxu0 0
  %805 = vmatprep.subr.bf16.mxu0 0
  %806 = vmatpush1.bf16.msra.mxu0 0
  %807 = vmatprep.subr.bf16.mxu0 0
  %808 = vmatpush1.bf16.msra.mxu0 0
  %809 = vmatprep.subr.bf16.mxu0 0
  %810 = vmatpush1.bf16.msra.mxu0 0
  %811 = vmatprep.subr.bf16.mxu0 0
  %812 = vmatpush1.bf16.msra.mxu0 0
  %813 = vmatprep.subr.bf16.mxu0 0
  %814 = vmatpush1.bf16.msra.mxu0 0
  %815 = vmatprep.subr.bf16.mxu0 0
  %816 = vmatpush1.bf16.msra.mxu0 0
  %817 = vmatprep.subr.bf16.mxu0 0
  %818 = vmatpush1.bf16.msra.mxu0 0
  %819 = vmatprep.subr.bf16.mxu0 0
  %820 = vmatpush1.bf16.msra.mxu0 0
  %821 = vmatprep.subr.bf16.mxu0 0
  %822 = vmatpush1.bf16.msra.mxu0 0
  %823 = vmatprep.subr.bf16.mxu0 0
  %824 = vmatpush1.bf16.msra.mxu0 0
  %825 = vmatprep.subr.bf16.mxu0 0
  %826 = vmatpush1.bf16.msra.mxu0 0
  %827 = vmatprep.subr.bf16.mxu0 0
  %828 = vmatpush1.bf16.msra.mxu0 0
  %829 = vmatprep.mubr.bf16.mxu0 0
  %830 = vmatmul.mubr.bf16.gmra.mrb[0].mxu0 %v795
  %v831 = vpop.f32.mrb[0].mxu0
  %v832 = vadd.f32 %v793, %v831
  %v833 = vpop.f32.mrb[0].mxu0
  %v834 = vpop.f32.mrb[0].mxu0
  %v835 = vadd.f32 %v793, %v834
  %v836 = vpop.f32.mrb[0].mxu0
  %837 = vdwg.mxu0
  %v838 = vmul.f32 %v832, 0.5
  %v839 = vmul.f32 %v835, 0.5
  %v840 = vmul.f32 %v832, 0.044715
  %v841 = vmul.f32 %v835, 0.044715
  %v842 = vmul.f32 %v840, %v832
  %v843 = vmul.f32 %v841, %v835
  %v844 = vmul.f32 %v842, %v832
  %v845 = vmul.f32 %v843, %v835
  %v846 = vadd.f32 %v832, %v844
  %v847 = vadd.f32 %v835, %v845
  %v848 = vmul.f32 %v846, 0.7978846
  %v849 = vmul.f32 %v847, 0.7978846
  %v850 = vtanh.pop %v848
  %v851 = vtanh.pop %v849
  %v852 = vadd.f32 %v850, 1.0
  %v853 = vadd.f32 %v851, 1.0
  %v854 = vmul.f32 %v838, %v852
  %v855 = vmul.f32 %v839, %v853
  %v856 = vpack.c.bf16 %v855, %v854
  %v857 = vlaneseq
  %v858 = vshrl.u32 %v857, 7
  %v859 = vsub.s32 7, %v858
  %v860 = vrot.slane %v99, %v859
  %863 = vrot.lane.b32.xlu0 %v103, 96
  %v864 = vpop.permute.xlu0 %863
  %865 = vrot.lane.b32.xlu0 %v104, 96
  %v866 = vpop.permute.xlu0 %865
  %v870 = vsel %vm25, %v856, 0
  %872 = vmatprep.subr.bf16.mxu0 0
  %873 = vmatpush1.bf16.msra.mxu0 %v864
  %874 = vmatprep.subr.bf16.mxu0 0
  %875 = vmatpush1.bf16.msra.mxu0 %v866
  %876 = vmatprep.subr.bf16.mxu0 0
  %877 = vmatpush1.bf16.msra.mxu0 0
  %878 = vmatprep.subr.bf16.mxu0 0
  %879 = vmatpush1.bf16.msra.mxu0 0
  %880 = vmatprep.subr.bf16.mxu0 0
  %881 = vmatpush1.bf16.msra.mxu0 0
  %882 = vmatprep.subr.bf16.mxu0 0
  %883 = vmatpush1.bf16.msra.mxu0 0
  %884 = vmatprep.subr.bf16.mxu0 0
  %885 = vmatpush1.bf16.msra.mxu0 0
  %886 = vmatprep.subr.bf16.mxu0 0
  %887 = vmatpush1.bf16.msra.mxu0 0
  %888 = vmatprep.subr.bf16.mxu0 0
  %889 = vmatpush1.bf16.msra.mxu0 0
  %890 = vmatprep.subr.bf16.mxu0 0
  %891 = vmatpush1.bf16.msra.mxu0 0
  %892 = vmatprep.subr.bf16.mxu0 0
  %893 = vmatpush1.bf16.msra.mxu0 0
  %894 = vmatprep.subr.bf16.mxu0 0
  %895 = vmatpush1.bf16.msra.mxu0 0
  %896 = vmatprep.subr.bf16.mxu0 0
  %897 = vmatpush1.bf16.msra.mxu0 0
  %898 = vmatprep.subr.bf16.mxu0 0
  %899 = vmatpush1.bf16.msra.mxu0 0
  %900 = vmatprep.subr.bf16.mxu0 0
  %901 = vmatpush1.bf16.msra.mxu0 0
  %902 = vmatprep.subr.bf16.mxu0 0
  %903 = vmatpush1.bf16.msra.mxu0 0
  %904 = vmatprep.mubr.bf16.mxu0 0
  %905 = vmatmul.mubr.bf16.gmra.mrb[0].mxu0 %v870
  %v906 = vpop.f32.mrb[0].mxu0
  %v907 = vadd.f32 %v860, %v906
  %v908 = vpop.f32.mrb[0].mxu0
  %v909 = vpop.f32.mrb[0].mxu0
  %v910 = vadd.f32 %v860, %v909
  %v911 = vpop.f32.mrb[0].mxu0
  %912 = vdwg.mxu0
  %v913 = vadd.f32 %v787, %v907
  %v914 = vadd.f32 %v788, %v910
  %v915 = vsel %vm25, %v913, 0.0
  %916 = vadd.xlane.f32.xlu0 %v915
  %v917 = vpop.xlane.xlu0 %916
  %v918 = vsel %vm25, %v914, 0.0
  %919 = vadd.xlane.f32.xlu0 %v918
  %v920 = vpop.xlane.xlu0 %919
  %v921 = vmul.f32 %v917, %v32
  %v922 = vmul.f32 %v920, %v32
  %v923 = vsub.f32 %v913, %v921
  %v924 = vsub.f32 %v914, %v922
  %v925 = vmul.f32 %v923, %v923
  %v926 = vmul.f32 %v924, %v924
  %v927 = vsel %vm25, %v925, 0.0
  %928 = vadd.xlane.f32.xlu0 %v927
  %v929 = vpop.xlane.xlu0 %928
  %v930 = vsel %vm25, %v926, 0.0
  %931 = vadd.xlane.f32.xlu0 %v930
  %v932 = vpop.xlane.xlu0 %931
  %v933 = vmul.f32 %v929, %v32
  %v934 = vmul.f32 %v932, %v32
  %v935 = vadd.f32 %v933, 1e-12
  %v936 = vadd.f32 %v934, 1e-12
  %v937 = vrsqrt.pop %v935
  %v938 = vrsqrt.pop %v936
  %v939 = vmul.f32 %v923, %v937
  %v940 = vmul.f32 %v924, %v938
  %v941 = vlaneseq
  %v942 = vshrl.u32 %v941, 7
  %v943 = vsub.s32 0, %v942
  %v944 = vrot.slane %v100, %v943
  %v945 = vmul.f32 %v939, %v944
  %v946 = vmul.f32 %v940, %v944
  %v947 = vlaneseq
  %v948 = vshrl.u32 %v947, 7
  %v949 = vsub.s32 1, %v948
  %v950 = vrot.slane %v100, %v949
  %v951 = vadd.f32 %v945, %v950
  %v952 = vadd.f32 %v946, %v950
  %s953 = scalar_lea.vmem %s3, 64
  %v954 = vld [vmem:[%s953] sm:$0xff]
  %v955 = vld [vmem:[%s953 + $0x8] sm:$0xff]
  %v956 = vld [vmem:[%s953 + $0x10] sm:$0xff]
  %v957 = vld [vmem:[%s953 + $0x18] sm:$0xff]
  %v958 = vld [vmem:[%s953 + $0x20] sm:$0xff]
  %v959 = vld [vmem:[%s953 + $0x28] sm:$0xff]
  %v960 = vld [vmem:[%s953 + $0x30] sm:$0xff]
  %v961 = vld [vmem:[%s953 + $0x38] sm:$0xff]
  %s962 = scalar_lea.vmem %s4, 16
  %v963 = vld [vmem:[%s962] sm:$0xff]
  %v964 = vld [vmem:[%s962 + $0x8] sm:$0x3]
  %v965 = vpack.c.bf16 %v956, %v954
  %v966 = vpack.c.bf16 %v960, %v958
  %v967 = vpack.c.bf16 %v957, %v955
  %v968 = vpack.c.bf16 %v961, %v959
  %v969 = vpack.c.bf16 %v952, %v951
  %v971 = vsel %vm25, %v969, 0
  %973 = vmatprep.subr.bf16.mxu0 0
  %974 = vmatpush1.bf16.msra.mxu0 %v965
  %975 = vmatprep.subr.bf16.mxu0 0
  %976 = vmatpush1.bf16.msra.mxu0 %v966
  %977 = vmatprep.subr.bf16.mxu0 0
  %978 = vmatpush1.bf16.msra.mxu0 0
  %979 = vmatprep.subr.bf16.mxu0 0
  %980 = vmatpush1.bf16.msra.mxu0 0
  %981 = vmatprep.subr.bf16.mxu0 0
  %982 = vmatpush1.bf16.msra.mxu0 0
  %983 = vmatprep.subr.bf16.mxu0 0
  %984 = vmatpush1.bf16.msra.mxu0 0
  %985 = vmatprep.subr.bf16.mxu0 0
  %986 = vmatpush1.bf16.msra.mxu0 0
  %987 = vmatprep.subr.bf16.mxu0 0
  %988 = vmatpush1.bf16.msra.mxu0 0
  %989 = vmatprep.subr.bf16.mxu0 0
  %990 = vmatpush1.bf16.msra.mxu0 0
  %991 = vmatprep.subr.bf16.mxu0 0
  %992 = vmatpush1.bf16.msra.mxu0 0
  %993 = vmatprep.subr.bf16.mxu0 0
  %994 = vmatpush1.bf16.msra.mxu0 0
  %995 = vmatprep.subr.bf16.mxu0 0
  %996 = vmatpush1.bf16.msra.mxu0 0
  %997 = vmatprep.subr.bf16.mxu0 0
  %998 = vmatpush1.bf16.msra.mxu0 0
  %999 = vmatprep.subr.bf16.mxu0 0
  %1000 = vmatpush1.bf16.msra.mxu0 0
  %1001 = vmatprep.subr.bf16.mxu0 0
  %1002 = vmatpush1.bf16.msra.mxu0 0
  %1003 = vmatprep.subr.bf16.mxu0 0
  %1004 = vmatpush1.bf16.msra.mxu0 0
  %1005 = vmatprep.mubr.bf16.mxu0 0
  %1006 = vmatmul.mubr.bf16.gmra.mrb[0].mxu0 %v971
  %v1007 = vpop.f32.mrb[0].mxu0
  %v1008 = vadd.f32 0.0, %v1007
  %v1009 = vpop.f32.mrb[0].mxu0
  %v1010 = vpop.f32.mrb[0].mxu0
  %v1011 = vadd.f32 0.0, %v1010
  %v1012 = vpop.f32.mrb[0].mxu0
  %1013 = vdwg.mxu0
  %v1014 = vlaneseq
  %v1015 = vshrl.u32 %v1014, 7
  %v1016 = vsub.s32 0, %v1015
  %v1017 = vrot.slane %v963, %v1016
  %v1018 = vadd.f32 %v1008, %v1017
  %v1019 = vadd.f32 %v1011, %v1017
  %v1020 = vlaneseq
  %v1021 = vshrl.u32 %v1020, 7
  %v1022 = vsub.s32 1, %v1021
  %v1023 = vrot.slane %v963, %v1022
  %1025 = vrot.lane.b32.xlu0 %v1023, 32
  %v1026 = vpop.permute.xlu0 %1025
  %v1028 = vadd.f32 %v1008, %v1026
  %v1029 = vadd.f32 %v1011, %v1026
  %v1030 = vlaneseq
  %v1031 = vshrl.u32 %v1030, 7
  %v1032 = vsub.s32 2, %v1031
  %v1033 = vrot.slane %v963, %v1032
  %1035 = vrot.lane.b32.xlu0 %v1033, 64
  %v1036 = vpop.permute.xlu0 %1035
  %v1038 = vadd.f32 %v1008, %v1036
  %v1039 = vadd.f32 %v1011, %v1036
  %v1040 = vpack.c.bf16 %v1018, %v1018
  %v1041 = vpack.c.bf16 %v1019, %v1019
  %v1042 = vpack.c.bf16 %v1028, %v1028
  %v1043 = vpack.c.bf16 %v1029, %v1029
  %v1044 = vpack.c.bf16 %v1038, %v1038
  %v1045 = vpack.c.bf16 %v1039, %v1039
  %1047 = vrot.lane.b32.xlu0 %v1042, 96
  %v1048 = vpop.permute.xlu0 %1047
  %v1050 = vsel %vm185, %v1040, 0
  %v1053 = vsel %vm185, %v1048, 0
  %1055 = vmatprep.subr.bf16.mxu0 0
  %1056 = vmatpush1.bf16.xpose.msra.mxu0 %v1053
  %1057 = vmatprep.subr.bf16.mxu0 0
  %1058 = vmatpush1.bf16.xpose.msra.mxu0 0
  %1059 = vmatprep.subr.bf16.mxu0 0
  %1060 = vmatpush1.bf16.xpose.msra.mxu0 0
  %1061 = vmatprep.subr.bf16.mxu0 0
  %1062 = vmatpush1.bf16.xpose.msra.mxu0 0
  %1063 = vmatprep.subr.bf16.mxu0 0
  %1064 = vmatpush1.bf16.xpose.msra.mxu0 0
  %1065 = vmatprep.subr.bf16.mxu0 0
  %1066 = vmatpush1.bf16.xpose.msra.mxu0 0
  %1067 = vmatprep.subr.bf16.mxu0 0
  %1068 = vmatpush1.bf16.xpose.msra.mxu0 0
  %1069 = vmatprep.subr.bf16.mxu0 0
  %1070 = vmatpush1.bf16.xpose.msra.mxu0 0
  %1071 = vmatprep.subr.bf16.mxu0 0
  %1072 = vmatpush1.bf16.xpose.msra.mxu0 0
  %1073 = vmatprep.subr.bf16.mxu0 0
  %1074 = vmatpush1.bf16.xpose.msra.mxu0 0
  %1075 = vmatprep.subr.bf16.mxu0 0
  %1076 = vmatpush1.bf16.xpose.msra.mxu0 0
  %1077 = vmatprep.subr.bf16.mxu0 0
  %1078 = vmatpush1.bf16.xpose.msra.mxu0 0
  %1079 = vmatprep.subr.bf16.mxu0 0
  %1080 = vmatpush1.bf16.xpose.msra.mxu0 0
  %1081 = vmatprep.subr.bf16.mxu0 0
  %1082 = vmatpush1.bf16.xpose.msra.mxu0 0
  %1083 = vmatprep.subr.bf16.mxu0 0
  %1084 = vmatpush1.bf16.xpose.msra.mxu0 0
  %1085 = vmatprep.subr.bf16.mxu0 0
  %1086 = vmatpush1.bf16.xpose.msra.mxu0 0
  %1087 = vmatprep.mubr.bf16.mxu0 0
  %1088 = vmatmul.mubr.bf16.gmra.mrb[0].mxu0 %v1050
  %v1089 = vpop.f32.mrb[0].mxu0
  %v1090 = vadd.f32 0.0, %v1089
  %v1091 = vpop.f32.mrb[0].mxu0
  %v1092 = vpop.f32.mrb[0].mxu0
  %v1093 = vpop.f32.mrb[0].mxu0
  %1094 = vdwg.mxu0
  %1096 = vrot.lane.b32.xlu0 %v1043, 96
  %v1097 = vpop.permute.xlu0 %1096
  %v1099 = vsel %vm185, %v1041, 0
  %v1102 = vsel %vm185, %v1097, 0
  %1104 = vmatprep.subr.bf16.mxu0 0
  %1105 = vmatpush1.bf16.xpose.msra.mxu0 %v1102
  %1106 = vmatprep.subr.bf16.mxu0 0
  %1107 = vmatpush1.bf16.xpose.msra.mxu0 0
  %1108 = vmatprep.subr.bf16.mxu0 0
  %1109 = vmatpush1.bf16.xpose.msra.mxu0 0
  %1110 = vmatprep.subr.bf16.mxu0 0
  %1111 = vmatpush1.bf16.xpose.msra.mxu0 0
  %1112 = vmatprep.subr.bf16.mxu0 0
  %1113 = vmatpush1.bf16.xpose.msra.mxu0 0
  %1114 = vmatprep.subr.bf16.mxu0 0
  %1115 = vmatpush1.bf16.xpose.msra.mxu0 0
  %1116 = vmatprep.subr.bf16.mxu0 0
  %1117 = vmatpush1.bf16.xpose.msra.mxu0 0
  %1118 = vmatprep.subr.bf16.mxu0 0
  %1119 = vmatpush1.bf16.xpose.msra.mxu0 0
  %1120 = vmatprep.subr.bf16.mxu0 0
  %1121 = vmatpush1.bf16.xpose.msra.mxu0 0
  %1122 = vmatprep.subr.bf16.mxu0 0
  %1123 = vmatpush1.bf16.xpose.msra.mxu0 0
  %1124 = vmatprep.subr.bf16.mxu0 0
  %1125 = vmatpush1.bf16.xpose.msra.mxu0 0
  %1126 = vmatprep.subr.bf16.mxu0 0
  %1127 = vmatpush1.bf16.xpose.msra.mxu0 0
  %1128 = vmatprep.subr.bf16.mxu0 0
  %1129 = vmatpush1.bf16.xpose.msra.mxu0 0
  %1130 = vmatprep.subr.bf16.mxu0 0
  %1131 = vmatpush1.bf16.xpose.msra.mxu0 0
  %1132 = vmatprep.subr.bf16.mxu0 0
  %1133 = vmatpush1.bf16.xpose.msra.mxu0 0
  %1134 = vmatprep.subr.bf16.mxu0 0
  %1135 = vmatpush1.bf16.xpose.msra.mxu0 0
  %1136 = vmatprep.mubr.bf16.mxu0 0
  %1137 = vmatmul.mubr.bf16.gmra.mrb[0].mxu0 %v1099
  %v1138 = vpop.f32.mrb[0].mxu0
  %v1139 = vadd.f32 0.0, %v1138
  %v1140 = vpop.f32.mrb[0].mxu0
  %v1141 = vpop.f32.mrb[0].mxu0
  %v1142 = vpop.f32.mrb[0].mxu0
  %1143 = vdwg.mxu0
  %v1144 = vmul.f32 %v1090, 0.25
  %v1145 = vmul.f32 %v1139, 0.25
  %v1146 = vadd.f32 %v1144, %v286
  %v1147 = vadd.f32 %v1145, %v290
  %v1148 = vsel %vm295, %v1146, -inf
  %1149 = vmax.xlane.f32.xlu0 %v1148
  %v1150 = vpop.xlane.xlu0 %1149
  %v1151 = vsel %vm295, %v1147, -inf
  %1152 = vmax.xlane.f32.xlu0 %v1151
  %v1153 = vpop.xlane.xlu0 %1152
  %v1154 = vsub.f32 %v1146, %v1150
  %v1155 = vsub.f32 %v1147, %v1153
  %v1156 = vmul.f32 %v1154, 1.442695
  %v1157 = vpow.pop %v1156
  %v1158 = vmul.f32 %v1155, 1.442695
  %v1159 = vpow.pop %v1158
  %v1160 = vsel %vm295, %v1157, 0.0
  %1161 = vadd.xlane.f32.xlu0 %v1160
  %v1162 = vpop.xlane.xlu0 %1161
  %v1163 = vsel %vm295, %v1159, 0.0
  %1164 = vadd.xlane.f32.xlu0 %v1163
  %v1165 = vpop.xlane.xlu0 %1164
  %v1166 = vrcp.pop %v1162
  %v1167 = vrcp.pop %v1165
  %v1168 = vmul.f32 %v1157, %v1166
  %v1169 = vmul.f32 %v1159, %v1167
  %v1170 = vpack.c.bf16 %v1168, %v1168
  %v1171 = vpack.c.bf16 %v1169, %v1169
  %1173 = vrot.lane.b32.xlu0 %v1044, 64
  %v1174 = vpop.permute.xlu0 %1173
  %v1176 = vsel %vm295, %v1170, 0
  %v1179 = vsel %vm326, %v1174, 0
  %1181 = vmatprep.subr.bf16.mxu0 0
  %1182 = vmatpush1.bf16.msra.mxu0 %v1179
  %1183 = vmatprep.subr.bf16.mxu0 0
  %1184 = vmatpush1.bf16.msra.mxu0 0
  %1185 = vmatprep.subr.bf16.mxu0 0
  %1186 = vmatpush1.bf16.msra.mxu0 0
  %1187 = vmatprep.subr.bf16.mxu0 0
  %1188 = vmatpush1.bf16.msra.mxu0 0
  %1189 = vmatprep.subr.bf16.mxu0 0
  %1190 = vmatpush1.bf16.msra.mxu0 0
  %1191 = vmatprep.subr.bf16.mxu0 0
  %1192 = vmatpush1.bf16.msra.mxu0 0
  %1193 = vmatprep.subr.bf16.mxu0 0
  %1194 = vmatpush1.bf16.msra.mxu0 0
  %1195 = vmatprep.subr.bf16.mxu0 0
  %1196 = vmatpush1.bf16.msra.mxu0 0
  %1197 = vmatprep.subr.bf16.mxu0 0
  %1198 = vmatpush1.bf16.msra.mxu0 0
  %1199 = vmatprep.subr.bf16.mxu0 0
  %1200 = vmatpush1.bf16.msra.mxu0 0
  %1201 = vmatprep.subr.bf16.mxu0 0
  %1202 = vmatpush1.bf16.msra.mxu0 0
  %1203 = vmatprep.subr.bf16.mxu0 0
  %1204 = vmatpush1.bf16.msra.mxu0 0
  %1205 = vmatprep.subr.bf16.mxu0 0
  %1206 = vmatpush1.bf16.msra.mxu0 0
  %1207 = vmatprep.subr.bf16.mxu0 0
  %1208 = vmatpush1.bf16.msra.mxu0 0
  %1209 = vmatprep.subr.bf16.mxu0 0
  %1210 = vmatpush1.bf16.msra.mxu0 0
  %1211 = vmatprep.subr.bf16.mxu0 0
  %1212 = vmatpush1.bf16.msra.mxu0 0
  %1213 = vmatprep.mubr.bf16.mxu0 0
  %1214 = vmatmul.mubr.bf16.gmra.mrb[0].mxu0 %v1176
  %v1215 = vpop.f32.mrb[0].mxu0
  %v1216 = vadd.f32 0.0, %v1215
  %v1217 = vpop.f32.mrb[0].mxu0
  %v1218 = vpop.f32.mrb[0].mxu0
  %v1219 = vpop.f32.mrb[0].mxu0
  %1220 = vdwg.mxu0
  %1222 = vrot.lane.b32.xlu0 %v1045, 64
  %v1223 = vpop.permute.xlu0 %1222
  %v1225 = vsel %vm295, %v1171, 0
  %v1228 = vsel %vm326, %v1223, 0
  %1230 = vmatprep.subr.bf16.mxu0 0
  %1231 = vmatpush1.bf16.msra.mxu0 %v1228
  %1232 = vmatprep.subr.bf16.mxu0 0
  %1233 = vmatpush1.bf16.msra.mxu0 0
  %1234 = vmatprep.subr.bf16.mxu0 0
  %1235 = vmatpush1.bf16.msra.mxu0 0
  %1236 = vmatprep.subr.bf16.mxu0 0
  %1237 = vmatpush1.bf16.msra.mxu0 0
  %1238 = vmatprep.subr.bf16.mxu0 0
  %1239 = vmatpush1.bf16.msra.mxu0 0
  %1240 = vmatprep.subr.bf16.mxu0 0
  %1241 = vmatpush1.bf16.msra.mxu0 0
  %1242 = vmatprep.subr.bf16.mxu0 0
  %1243 = vmatpush1.bf16.msra.mxu0 0
  %1244 = vmatprep.subr.bf16.mxu0 0
  %1245 = vmatpush1.bf16.msra.mxu0 0
  %1246 = vmatprep.subr.bf16.mxu0 0
  %1247 = vmatpush1.bf16.msra.mxu0 0
  %1248 = vmatprep.subr.bf16.mxu0 0
  %1249 = vmatpush1.bf16.msra.mxu0 0
  %1250 = vmatprep.subr.bf16.mxu0 0
  %1251 = vmatpush1.bf16.msra.mxu0 0
  %1252 = vmatprep.subr.bf16.mxu0 0
  %1253 = vmatpush1.bf16.msra.mxu0 0
  %1254 = vmatprep.subr.bf16.mxu0 0
  %1255 = vmatpush1.bf16.msra.mxu0 0
  %1256 = vmatprep.subr.bf16.mxu0 0
  %1257 = vmatpush1.bf16.msra.mxu0 0
  %1258 = vmatprep.subr.bf16.mxu0 0
  %1259 = vmatpush1.bf16.msra.mxu0 0
  %1260 = vmatprep.subr.bf16.mxu0 0
  %1261 = vmatpush1.bf16.msra.mxu0 0
  %1262 = vmatprep.mubr.bf16.mxu0 0
  %1263 = vmatmul.mubr.bf16.gmra.mrb[0].mxu0 %v1225
  %v1264 = vpop.f32.mrb[0].mxu0
  %v1265 = vadd.f32 0.0, %v1264
  %v1266 = vpop.f32.mrb[0].mxu0
  %v1267 = vpop.f32.mrb[0].mxu0
  %v1268 = vpop.f32.mrb[0].mxu0
  %1269 = vdwg.mxu0
  %v1270 = vpack.c.bf16 %v1265, %v1216
  %1272 = vrot.lane.b32.xlu0 %v1040, 112
  %v1273 = vpop.permute.xlu0 %1272
  %1274 = vrot.lane.b32.xlu0 %v1042, 80
  %v1275 = vpop.permute.xlu0 %1274
  %v1277 = vsel %vm185, %v1273, 0
  %v1280 = vsel %vm185, %v1275, 0
  %1282 = vmatprep.subr.bf16.mxu0 0
  %1283 = vmatpush1.bf16.xpose.msra.mxu0 %v1280
  %1284 = vmatprep.subr.bf16.mxu0 0
  %1285 = vmatpush1.bf16.xpose.msra.mxu0 0
  %1286 = vmatprep.subr.bf16.mxu0 0
  %1287 = vmatpush1.bf16.xpose.msra.mxu0 0
  %1288 = vmatprep.subr.bf16.mxu0 0
  %1289 = vmatpush1.bf16.xpose.msra.mxu0 0
  %1290 = vmatprep.subr.bf16.mxu0 0
  %1291 = vmatpush1.bf16.xpose.msra.mxu0 0
  %1292 = vmatprep.subr.bf16.mxu0 0
  %1293 = vmatpush1.bf16.xpose.msra.mxu0 0
  %1294 = vmatprep.subr.bf16.mxu0 0
  %1295 = vmatpush1.bf16.xpose.msra.mxu0 0
  %1296 = vmatprep.subr.bf16.mxu0 0
  %1297 = vmatpush1.bf16.xpose.msra.mxu0 0
  %1298 = vmatprep.subr.bf16.mxu0 0
  %1299 = vmatpush1.bf16.xpose.msra.mxu0 0
  %1300 = vmatprep.subr.bf16.mxu0 0
  %1301 = vmatpush1.bf16.xpose.msra.mxu0 0
  %1302 = vmatprep.subr.bf16.mxu0 0
  %1303 = vmatpush1.bf16.xpose.msra.mxu0 0
  %1304 = vmatprep.subr.bf16.mxu0 0
  %1305 = vmatpush1.bf16.xpose.msra.mxu0 0
  %1306 = vmatprep.subr.bf16.mxu0 0
  %1307 = vmatpush1.bf16.xpose.msra.mxu0 0
  %1308 = vmatprep.subr.bf16.mxu0 0
  %1309 = vmatpush1.bf16.xpose.msra.mxu0 0
  %1310 = vmatprep.subr.bf16.mxu0 0
  %1311 = vmatpush1.bf16.xpose.msra.mxu0 0
  %1312 = vmatprep.subr.bf16.mxu0 0
  %1313 = vmatpush1.bf16.xpose.msra.mxu0 0
  %1314 = vmatprep.mubr.bf16.mxu0 0
  %1315 = vmatmul.mubr.bf16.gmra.mrb[0].mxu0 %v1277
  %v1316 = vpop.f32.mrb[0].mxu0
  %v1317 = vadd.f32 0.0, %v1316
  %v1318 = vpop.f32.mrb[0].mxu0
  %v1319 = vpop.f32.mrb[0].mxu0
  %v1320 = vpop.f32.mrb[0].mxu0
  %1321 = vdwg.mxu0
  %1323 = vrot.lane.b32.xlu0 %v1041, 112
  %v1324 = vpop.permute.xlu0 %1323
  %1325 = vrot.lane.b32.xlu0 %v1043, 80
  %v1326 = vpop.permute.xlu0 %1325
  %v1328 = vsel %vm185, %v1324, 0
  %v1331 = vsel %vm185, %v1326, 0
  %1333 = vmatprep.subr.bf16.mxu0 0
  %1334 = vmatpush1.bf16.xpose.msra.mxu0 %v1331
  %1335 = vmatprep.subr.bf16.mxu0 0
  %1336 = vmatpush1.bf16.xpose.msra.mxu0 0
  %1337 = vmatprep.subr.bf16.mxu0 0
  %1338 = vmatpush1.bf16.xpose.msra.mxu0 0
  %1339 = vmatprep.subr.bf16.mxu0 0
  %1340 = vmatpush1.bf16.xpose.msra.mxu0 0
  %1341 = vmatprep.subr.bf16.mxu0 0
  %1342 = vmatpush1.bf16.xpose.msra.mxu0 0
  %1343 = vmatprep.subr.bf16.mxu0 0
  %1344 = vmatpush1.bf16.xpose.msra.mxu0 0
  %1345 = vmatprep.subr.bf16.mxu0 0
  %1346 = vmatpush1.bf16.xpose.msra.mxu0 0
  %1347 = vmatprep.subr.bf16.mxu0 0
  %1348 = vmatpush1.bf16.xpose.msra.mxu0 0
  %1349 = vmatprep.subr.bf16.mxu0 0
  %1350 = vmatpush1.bf16.xpose.msra.mxu0 0
  %1351 = vmatprep.subr.bf16.mxu0 0
  %1352 = vmatpush1.bf16.xpose.msra.mxu0 0
  %1353 = vmatprep.subr.bf16.mxu0 0
  %1354 = vmatpush1.bf16.xpose.msra.mxu0 0
  %1355 = vmatprep.subr.bf16.mxu0 0
  %1356 = vmatpush1.bf16.xpose.msra.mxu0 0
  %1357 = vmatprep.subr.bf16.mxu0 0
  %1358 = vmatpush1.bf16.xpose.msra.mxu0 0
  %1359 = vmatprep.subr.bf16.mxu0 0
  %1360 = vmatpush1.bf16.xpose.msra.mxu0 0
  %1361 = vmatprep.subr.bf16.mxu0 0
  %1362 = vmatpush1.bf16.xpose.msra.mxu0 0
  %1363 = vmatprep.subr.bf16.mxu0 0
  %1364 = vmatpush1.bf16.xpose.msra.mxu0 0
  %1365 = vmatprep.mubr.bf16.mxu0 0
  %1366 = vmatmul.mubr.bf16.gmra.mrb[0].mxu0 %v1328
  %v1367 = vpop.f32.mrb[0].mxu0
  %v1368 = vadd.f32 0.0, %v1367
  %v1369 = vpop.f32.mrb[0].mxu0
  %v1370 = vpop.f32.mrb[0].mxu0
  %v1371 = vpop.f32.mrb[0].mxu0
  %1372 = vdwg.mxu0
  %v1373 = vmul.f32 %v1317, 0.25
  %v1374 = vmul.f32 %v1368, 0.25
  %v1375 = vadd.f32 %v1373, %v286
  %v1376 = vadd.f32 %v1374, %v290
  %v1377 = vsel %vm295, %v1375, -inf
  %1378 = vmax.xlane.f32.xlu0 %v1377
  %v1379 = vpop.xlane.xlu0 %1378
  %v1380 = vsel %vm295, %v1376, -inf
  %1381 = vmax.xlane.f32.xlu0 %v1380
  %v1382 = vpop.xlane.xlu0 %1381
  %v1383 = vsub.f32 %v1375, %v1379
  %v1384 = vsub.f32 %v1376, %v1382
  %v1385 = vmul.f32 %v1383, 1.442695
  %v1386 = vpow.pop %v1385
  %v1387 = vmul.f32 %v1384, 1.442695
  %v1388 = vpow.pop %v1387
  %v1389 = vsel %vm295, %v1386, 0.0
  %1390 = vadd.xlane.f32.xlu0 %v1389
  %v1391 = vpop.xlane.xlu0 %1390
  %v1392 = vsel %vm295, %v1388, 0.0
  %1393 = vadd.xlane.f32.xlu0 %v1392
  %v1394 = vpop.xlane.xlu0 %1393
  %v1395 = vrcp.pop %v1391
  %v1396 = vrcp.pop %v1394
  %v1397 = vmul.f32 %v1386, %v1395
  %v1398 = vmul.f32 %v1388, %v1396
  %v1399 = vpack.c.bf16 %v1397, %v1397
  %v1400 = vpack.c.bf16 %v1398, %v1398
  %1401 = vrot.lane.b32.xlu0 %v1044, 48
  %v1402 = vpop.permute.xlu0 %1401
  %v1404 = vsel %vm295, %v1399, 0
  %v1407 = vsel %vm326, %v1402, 0
  %1409 = vmatprep.subr.bf16.mxu0 0
  %1410 = vmatpush1.bf16.msra.mxu0 %v1407
  %1411 = vmatprep.subr.bf16.mxu0 0
  %1412 = vmatpush1.bf16.msra.mxu0 0
  %1413 = vmatprep.subr.bf16.mxu0 0
  %1414 = vmatpush1.bf16.msra.mxu0 0
  %1415 = vmatprep.subr.bf16.mxu0 0
  %1416 = vmatpush1.bf16.msra.mxu0 0
  %1417 = vmatprep.subr.bf16.mxu0 0
  %1418 = vmatpush1.bf16.msra.mxu0 0
  %1419 = vmatprep.subr.bf16.mxu0 0
  %1420 = vmatpush1.bf16.msra.mxu0 0
  %1421 = vmatprep.subr.bf16.mxu0 0
  %1422 = vmatpush1.bf16.msra.mxu0 0
  %1423 = vmatprep.subr.bf16.mxu0 0
  %1424 = vmatpush1.bf16.msra.mxu0 0
  %1425 = vmatprep.subr.bf16.mxu0 0
  %1426 = vmatpush1.bf16.msra.mxu0 0
  %1427 = vmatprep.subr.bf16.mxu0 0
  %1428 = vmatpush1.bf16.msra.mxu0 0
  %1429 = vmatprep.subr.bf16.mxu0 0
  %1430 = vmatpush1.bf16.msra.mxu0 0
  %1431 = vmatprep.subr.bf16.mxu0 0
  %1432 = vmatpush1.bf16.msra.mxu0 0
  %1433 = vmatprep.subr.bf16.mxu0 0
  %1434 = vmatpush1.bf16.msra.mxu0 0
  %1435 = vmatprep.subr.bf16.mxu0 0
  %1436 = vmatpush1.bf16.msra.mxu0 0
  %1437 = vmatprep.subr.bf16.mxu0 0
  %1438 = vmatpush1.bf16.msra.mxu0 0
  %1439 = vmatprep.subr.bf16.mxu0 0
  %1440 = vmatpush1.bf16.msra.mxu0 0
  %1441 = vmatprep.mubr.bf16.mxu0 0
  %1442 = vmatmul.mubr.bf16.gmra.mrb[0].mxu0 %v1404
  %v1443 = vpop.f32.mrb[0].mxu0
  %v1444 = vadd.f32 0.0, %v1443
  %v1445 = vpop.f32.mrb[0].mxu0
  %v1446 = vpop.f32.mrb[0].mxu0
  %v1447 = vpop.f32.mrb[0].mxu0
  %1448 = vdwg.mxu0
  %1449 = vrot.lane.b32.xlu0 %v1045, 48
  %v1450 = vpop.permute.xlu0 %1449
  %v1452 = vsel %vm295, %v1400, 0
  %v1455 = vsel %vm326, %v1450, 0
  %1457 = vmatprep.subr.bf16.mxu0 0
  %1458 = vmatpush1.bf16.msra.mxu0 %v1455
  %1459 = vmatprep.subr.bf16.mxu0 0
  %1460 = vmatpush1.bf16.msra.mxu0 0
  %1461 = vmatprep.subr.bf16.mxu0 0
  %1462 = vmatpush1.bf16.msra.mxu0 0
  %1463 = vmatprep.subr.bf16.mxu0 0
  %1464 = vmatpush1.bf16.msra.mxu0 0
  %1465 = vmatprep.subr.bf16.mxu0 0
  %1466 = vmatpush1.bf16.msra.mxu0 0
  %1467 = vmatprep.subr.bf16.mxu0 0
  %1468 = vmatpush1.bf16.msra.mxu0 0
  %1469 = vmatprep.subr.bf16.mxu0 0
  %1470 = vmatpush1.bf16.msra.mxu0 0
  %1471 = vmatprep.subr.bf16.mxu0 0
  %1472 = vmatpush1.bf16.msra.mxu0 0
  %1473 = vmatprep.subr.bf16.mxu0 0
  %1474 = vmatpush1.bf16.msra.mxu0 0
  %1475 = vmatprep.subr.bf16.mxu0 0
  %1476 = vmatpush1.bf16.msra.mxu0 0
  %1477 = vmatprep.subr.bf16.mxu0 0
  %1478 = vmatpush1.bf16.msra.mxu0 0
  %1479 = vmatprep.subr.bf16.mxu0 0
  %1480 = vmatpush1.bf16.msra.mxu0 0
  %1481 = vmatprep.subr.bf16.mxu0 0
  %1482 = vmatpush1.bf16.msra.mxu0 0
  %1483 = vmatprep.subr.bf16.mxu0 0
  %1484 = vmatpush1.bf16.msra.mxu0 0
  %1485 = vmatprep.subr.bf16.mxu0 0
  %1486 = vmatpush1.bf16.msra.mxu0 0
  %1487 = vmatprep.subr.bf16.mxu0 0
  %1488 = vmatpush1.bf16.msra.mxu0 0
  %1489 = vmatprep.mubr.bf16.mxu0 0
  %1490 = vmatmul.mubr.bf16.gmra.mrb[0].mxu0 %v1452
  %v1491 = vpop.f32.mrb[0].mxu0
  %v1492 = vadd.f32 0.0, %v1491
  %v1493 = vpop.f32.mrb[0].mxu0
  %v1494 = vpop.f32.mrb[0].mxu0
  %v1495 = vpop.f32.mrb[0].mxu0
  %1496 = vdwg.mxu0
  %v1497 = vpack.c.bf16 %v1492, %v1444
  %1499 = vrot.lane.b32.xlu0 %v966, 32
  %v1500 = vpop.permute.xlu0 %1499
  %v1503 = vsel %vm185, %v1497, 0
  %1505 = vmatprep.subr.bf16.mxu0 0
  %1506 = vmatpush1.bf16.msra.mxu0 %v1500
  %1507 = vmatprep.subr.bf16.mxu0 0
  %1508 = vmatpush1.bf16.msra.mxu0 0
  %1509 = vmatprep.subr.bf16.mxu0 0
  %1510 = vmatpush1.bf16.msra.mxu0 0
  %1511 = vmatprep.subr.bf16.mxu0 0
  %1512 = vmatpush1.bf16.msra.mxu0 0
  %1513 = vmatprep.subr.bf16.mxu0 0
  %1514 = vmatpush1.bf16.msra.mxu0 0
  %1515 = vmatprep.subr.bf16.mxu0 0
  %1516 = vmatpush1.bf16.msra.mxu0 0
  %1517 = vmatprep.subr.bf16.mxu0 0
  %1518 = vmatpush1.bf16.msra.mxu0 0
  %1519 = vmatprep.subr.bf16.mxu0 0
  %1520 = vmatpush1.bf16.msra.mxu0 0
  %1521 = vmatprep.subr.bf16.mxu0 0
  %1522 = vmatpush1.bf16.msra.mxu0 0
  %1523 = vmatprep.subr.bf16.mxu0 0
  %1524 = vmatpush1.bf16.msra.mxu0 0
  %1525 = vmatprep.subr.bf16.mxu0 0
  %1526 = vmatpush1.bf16.msra.mxu0 0
  %1527 = vmatprep.subr.bf16.mxu0 0
  %1528 = vmatpush1.bf16.msra.mxu0 0
  %1529 = vmatprep.subr.bf16.mxu0 0
  %1530 = vmatpush1.bf16.msra.mxu0 0
  %1531 = vmatprep.subr.bf16.mxu0 0
  %1532 = vmatpush1.bf16.msra.mxu0 0
  %1533 = vmatprep.subr.bf16.mxu0 0
  %1534 = vmatpush1.bf16.msra.mxu0 0
  %1535 = vmatprep.subr.bf16.mxu0 0
  %1536 = vmatpush1.bf16.msra.mxu0 0
  %1537 = vmatprep.mubr.bf16.mxu0 0
  %1538 = vmatmul.mubr.bf16.gmra.mrb[0].mxu0 %v1503
  %v1539 = vpop.f32.mrb[0].mxu0
  %v1540 = vadd.f32 0.0, %v1539
  %v1541 = vpop.f32.mrb[0].mxu0
  %v1542 = vpop.f32.mrb[0].mxu0
  %v1543 = vadd.f32 0.0, %v1542
  %v1544 = vpop.f32.mrb[0].mxu0
  %1545 = vdwg.mxu0
  %1547 = vrot.lane.b32.xlu0 %v965, 32
  %v1548 = vpop.permute.xlu0 %1547
  %v1551 = vsel %vm185, %v1270, 0
  %1553 = vmatprep.subr.bf16.mxu0 0
  %1554 = vmatpush1.bf16.msra.mxu0 %v1548
  %1555 = vmatprep.subr.bf16.mxu0 0
  %1556 = vmatpush1.bf16.msra.mxu0 0
  %1557 = vmatprep.subr.bf16.mxu0 0
  %1558 = vmatpush1.bf16.msra.mxu0 0
  %1559 = vmatprep.subr.bf16.mxu0 0
  %1560 = vmatpush1.bf16.msra.mxu0 0
  %1561 = vmatprep.subr.bf16.mxu0 0
  %1562 = vmatpush1.bf16.msra.mxu0 0
  %1563 = vmatprep.subr.bf16.mxu0 0
  %1564 = vmatpush1.bf16.msra.mxu0 0
  %1565 = vmatprep.subr.bf16.mxu0 0
  %1566 = vmatpush1.bf16.msra.mxu0 0
  %1567 = vmatprep.subr.bf16.mxu0 0
  %1568 = vmatpush1.bf16.msra.mxu0 0
  %1569 = vmatprep.subr.bf16.mxu0 0
  %1570 = vmatpush1.bf16.msra.mxu0 0
  %1571 = vmatprep.subr.bf16.mxu0 0
  %1572 = vmatpush1.bf16.msra.mxu0 0
  %1573 = vmatprep.subr.bf16.mxu0 0
  %1574 = vmatpush1.bf16.msra.mxu0 0
  %1575 = vmatprep.subr.bf16.mxu0 0
  %1576 = vmatpush1.bf16.msra.mxu0 0
  %1577 = vmatprep.subr.bf16.mxu0 0
  %1578 = vmatpush1.bf16.msra.mxu0 0
  %1579 = vmatprep.subr.bf16.mxu0 0
  %1580 = vmatpush1.bf16.msra.mxu0 0
  %1581 = vmatprep.subr.bf16.mxu0 0
  %1582 = vmatpush1.bf16.msra.mxu0 0
  %1583 = vmatprep.subr.bf16.mxu0 0
  %1584 = vmatpush1.bf16.msra.mxu0 0
  %1585 = vmatprep.mubr.bf16.mxu0 0
  %1586 = vmatmul.mubr.bf16.gmra.mrb[0].mxu0 %v1551
  %v1587 = vpop.f32.mrb[0].mxu0
  %v1588 = vadd.f32 %v1540, %v1587
  %v1589 = vpop.f32.mrb[0].mxu0
  %v1590 = vpop.f32.mrb[0].mxu0
  %v1591 = vadd.f32 %v1543, %v1590
  %v1592 = vpop.f32.mrb[0].mxu0
  %1593 = vdwg.mxu0
  %v1594 = vlaneseq
  %v1595 = vshrl.u32 %v1594, 7
  %v1596 = vsub.s32 3, %v1595
  %v1597 = vrot.slane %v963, %v1596
  %v1598 = vadd.f32 %v1588, %v1597
  %v1599 = vadd.f32 %v1591, %v1597
  %v1600 = vadd.f32 %v951, %v1598
  %v1601 = vadd.f32 %v952, %v1599
  %v1602 = vsel %vm25, %v1600, 0.0
  %1603 = vadd.xlane.f32.xlu0 %v1602
  %v1604 = vpop.xlane.xlu0 %1603
  %v1605 = vsel %vm25, %v1601, 0.0
  %1606 = vadd.xlane.f32.xlu0 %v1605
  %v1607 = vpop.xlane.xlu0 %1606
  %v1608 = vmul.f32 %v1604, %v32
  %v1609 = vmul.f32 %v1607, %v32
  %v1610 = vsub.f32 %v1600, %v1608
  %v1611 = vsub.f32 %v1601, %v1609
  %v1612 = vmul.f32 %v1610, %v1610
  %v1613 = vmul.f32 %v1611, %v1611
  %v1614 = vsel %vm25, %v1612, 0.0
  %1615 = vadd.xlane.f32.xlu0 %v1614
  %v1616 = vpop.xlane.xlu0 %1615
  %v1617 = vsel %vm25, %v1613, 0.0
  %1618 = vadd.xlane.f32.xlu0 %v1617
  %v1619 = vpop.xlane.xlu0 %1618
  %v1620 = vmul.f32 %v1616, %v32
  %v1621 = vmul.f32 %v1619, %v32
  %v1622 = vadd.f32 %v1620, 1e-12
  %v1623 = vadd.f32 %v1621, 1e-12
  %v1624 = vrsqrt.pop %v1622
  %v1625 = vrsqrt.pop %v1623
  %v1626 = vmul.f32 %v1610, %v1624
  %v1627 = vmul.f32 %v1611, %v1625
  %v1628 = vlaneseq
  %v1629 = vshrl.u32 %v1628, 7
  %v1630 = vsub.s32 4, %v1629
  %v1631 = vrot.slane %v963, %v1630
  %v1632 = vmul.f32 %v1626, %v1631
  %v1633 = vmul.f32 %v1627, %v1631
  %v1634 = vlaneseq
  %v1635 = vshrl.u32 %v1634, 7
  %v1636 = vsub.s32 5, %v1635
  %v1637 = vrot.slane %v963, %v1636
  %v1638 = vadd.f32 %v1632, %v1637
  %v1639 = vadd.f32 %v1633, %v1637
  %v1640 = vpack.c.bf16 %v1639, %v1638
  %v1641 = vlaneseq
  %v1642 = vshrl.u32 %v1641, 7
  %v1643 = vsub.s32 6, %v1642
  %v1644 = vrot.slane %v963, %v1643
  %v1646 = vsel %vm25, %v1640, 0
  %1648 = vmatprep.subr.bf16.mxu0 0
  %1649 = vmatpush1.bf16.msra.mxu0 %v967
  %1650 = vmatprep.subr.bf16.mxu0 0
  %1651 = vmatpush1.bf16.msra.mxu0 %v968
  %1652 = vmatprep.subr.bf16.mxu0 0
  %1653 = vmatpush1.bf16.msra.mxu0 0
  %1654 = vmatprep.subr.bf16.mxu0 0
  %1655 = vmatpush1.bf16.msra.mxu0 0
  %1656 = vmatprep.subr.bf16.mxu0 0
  %1657 = vmatpush1.bf16.msra.mxu0 0
  %1658 = vmatprep.subr.bf16.mxu0 0
  %1659 = vmatpush1.bf16.msra.mxu0 0
  %1660 = vmatprep.subr.bf16.mxu0 0
  %1661 = vmatpush1.bf16.msra.mxu0 0
  %1662 = vmatprep.subr.bf16.mxu0 0
  %1663 = vmatpush1.bf16.msra.mxu0 0
  %1664 = vmatprep.subr.bf16.mxu0 0
  %1665 = vmatpush1.bf16.msra.mxu0 0
  %1666 = vmatprep.subr.bf16.mxu0 0
  %1667 = vmatpush1.bf16.msra.mxu0 0
  %1668 = vmatprep.subr.bf16.mxu0 0
  %1669 = vmatpush1.bf16.msra.mxu0 0
  %1670 = vmatprep.subr.bf16.mxu0 0
  %1671 = vmatpush1.bf16.msra.mxu0 0
  %1672 = vmatprep.subr.bf16.mxu0 0
  %1673 = vmatpush1.bf16.msra.mxu0 0
  %1674 = vmatprep.subr.bf16.mxu0 0
  %1675 = vmatpush1.bf16.msra.mxu0 0
  %1676 = vmatprep.subr.bf16.mxu0 0
  %1677 = vmatpush1.bf16.msra.mxu0 0
  %1678 = vmatprep.subr.bf16.mxu0 0
  %1679 = vmatpush1.bf16.msra.mxu0 0
  %1680 = vmatprep.mubr.bf16.mxu0 0
  %1681 = vmatmul.mubr.bf16.gmra.mrb[0].mxu0 %v1646
  %v1682 = vpop.f32.mrb[0].mxu0
  %v1683 = vadd.f32 %v1644, %v1682
  %v1684 = vpop.f32.mrb[0].mxu0
  %v1685 = vpop.f32.mrb[0].mxu0
  %v1686 = vadd.f32 %v1644, %v1685
  %v1687 = vpop.f32.mrb[0].mxu0
  %1688 = vdwg.mxu0
  %v1689 = vmul.f32 %v1683, 0.5
  %v1690 = vmul.f32 %v1686, 0.5
  %v1691 = vmul.f32 %v1683, 0.044715
  %v1692 = vmul.f32 %v1686, 0.044715
  %v1693 = vmul.f32 %v1691, %v1683
  %v1694 = vmul.f32 %v1692, %v1686
  %v1695 = vmul.f32 %v1693, %v1683
  %v1696 = vmul.f32 %v1694, %v1686
  %v1697 = vadd.f32 %v1683, %v1695
  %v1698 = vadd.f32 %v1686, %v1696
  %v1699 = vmul.f32 %v1697, 0.7978846
  %v1700 = vmul.f32 %v1698, 0.7978846
  %v1701 = vtanh.pop %v1699
  %v1702 = vtanh.pop %v1700
  %v1703 = vadd.f32 %v1701, 1.0
  %v1704 = vadd.f32 %v1702, 1.0
  %v1705 = vmul.f32 %v1689, %v1703
  %v1706 = vmul.f32 %v1690, %v1704
  %v1707 = vpack.c.bf16 %v1706, %v1705
  %v1708 = vlaneseq
  %v1709 = vshrl.u32 %v1708, 7
  %v1710 = vsub.s32 7, %v1709
  %v1711 = vrot.slane %v963, %v1710
  %1714 = vrot.lane.b32.xlu0 %v967, 96
  %v1715 = vpop.permute.xlu0 %1714
  %1716 = vrot.lane.b32.xlu0 %v968, 96
  %v1717 = vpop.permute.xlu0 %1716
  %v1721 = vsel %vm25, %v1707, 0
  %1723 = vmatprep.subr.bf16.mxu0 0
  %1724 = vmatpush1.bf16.msra.mxu0 %v1715
  %1725 = vmatprep.subr.bf16.mxu0 0
  %1726 = vmatpush1.bf16.msra.mxu0 %v1717
  %1727 = vmatprep.subr.bf16.mxu0 0
  %1728 = vmatpush1.bf16.msra.mxu0 0
  %1729 = vmatprep.subr.bf16.mxu0 0
  %1730 = vmatpush1.bf16.msra.mxu0 0
  %1731 = vmatprep.subr.bf16.mxu0 0
  %1732 = vmatpush1.bf16.msra.mxu0 0
  %1733 = vmatprep.subr.bf16.mxu0 0
  %1734 = vmatpush1.bf16.msra.mxu0 0
  %1735 = vmatprep.subr.bf16.mxu0 0
  %1736 = vmatpush1.bf16.msra.mxu0 0
  %1737 = vmatprep.subr.bf16.mxu0 0
  %1738 = vmatpush1.bf16.msra.mxu0 0
  %1739 = vmatprep.subr.bf16.mxu0 0
  %1740 = vmatpush1.bf16.msra.mxu0 0
  %1741 = vmatprep.subr.bf16.mxu0 0
  %1742 = vmatpush1.bf16.msra.mxu0 0
  %1743 = vmatprep.subr.bf16.mxu0 0
  %1744 = vmatpush1.bf16.msra.mxu0 0
  %1745 = vmatprep.subr.bf16.mxu0 0
  %1746 = vmatpush1.bf16.msra.mxu0 0
  %1747 = vmatprep.subr.bf16.mxu0 0
  %1748 = vmatpush1.bf16.msra.mxu0 0
  %1749 = vmatprep.subr.bf16.mxu0 0
  %1750 = vmatpush1.bf16.msra.mxu0 0
  %1751 = vmatprep.subr.bf16.mxu0 0
  %1752 = vmatpush1.bf16.msra.mxu0 0
  %1753 = vmatprep.subr.bf16.mxu0 0
  %1754 = vmatpush1.bf16.msra.mxu0 0
  %1755 = vmatprep.mubr.bf16.mxu0 0
  %1756 = vmatmul.mubr.bf16.gmra.mrb[0].mxu0 %v1721
  %v1757 = vpop.f32.mrb[0].mxu0
  %v1758 = vadd.f32 %v1711, %v1757
  %v1759 = vpop.f32.mrb[0].mxu0
  %v1760 = vpop.f32.mrb[0].mxu0
  %v1761 = vadd.f32 %v1711, %v1760
  %v1762 = vpop.f32.mrb[0].mxu0
  %1763 = vdwg.mxu0
  %v1764 = vadd.f32 %v1638, %v1758
  %v1765 = vadd.f32 %v1639, %v1761
  %v1766 = vsel %vm25, %v1764, 0.0
  %1767 = vadd.xlane.f32.xlu0 %v1766
  %v1768 = vpop.xlane.xlu0 %1767
  %v1769 = vsel %vm25, %v1765, 0.0
  %1770 = vadd.xlane.f32.xlu0 %v1769
  %v1771 = vpop.xlane.xlu0 %1770
  %v1772 = vmul.f32 %v1768, %v32
  %v1773 = vmul.f32 %v1771, %v32
  %v1774 = vsub.f32 %v1764, %v1772
  %v1775 = vsub.f32 %v1765, %v1773
  %v1776 = vmul.f32 %v1774, %v1774
  %v1777 = vmul.f32 %v1775, %v1775
  %v1778 = vsel %vm25, %v1776, 0.0
  %1779 = vadd.xlane.f32.xlu0 %v1778
  %v1780 = vpop.xlane.xlu0 %1779
  %v1781 = vsel %vm25, %v1777, 0.0
  %1782 = vadd.xlane.f32.xlu0 %v1781
  %v1783 = vpop.xlane.xlu0 %1782
  %v1784 = vmul.f32 %v1780, %v32
  %v1785 = vmul.f32 %v1783, %v32
  %v1786 = vadd.f32 %v1784, 1e-12
  %v1787 = vadd.f32 %v1785, 1e-12
  %v1788 = vrsqrt.pop %v1786
  %v1789 = vrsqrt.pop %v1787
  %v1790 = vmul.f32 %v1774, %v1788
  %v1791 = vmul.f32 %v1775, %v1789
  %v1792 = vlaneseq
  %v1793 = vshrl.u32 %v1792, 7
  %v1794 = vsub.s32 0, %v1793
  %v1795 = vrot.slane %v964, %v1794
  %v1796 = vmul.f32 %v1790, %v1795
  %v1797 = vmul.f32 %v1791, %v1795
  %v1798 = vlaneseq
  %v1799 = vshrl.u32 %v1798, 7
  %v1800 = vsub.s32 1, %v1799
  %v1801 = vrot.slane %v964, %v1800
  %v1802 = vadd.f32 %v1796, %v1801
  %v1803 = vadd.f32 %v1797, %v1801
  %v1804 = vld [vmem:[%s2 + $0x2] sm:$0x1]
  %v1805 = vlaneseq
  %v1806 = vshrl.u32 %v1805, 7
  %v1807 = vsub.s32 0, %v1806
  %v1808 = vrot.slane %v1804, %v1807
  %v1809 = vmul.f32 %v1802, %v1808
  %v1810 = vmul.f32 %v1803, %v1808
  %v1813 = vrot.slane %v1810, 7
  %vm1814 = vcmask 1041409
  %v1815 = vsel %vm1814, %v1813, %v1809
  %vm1817 = vcmask 254976
  %v1818 = vsel %vm1817, %v1815, 0.0
  %1819 = vadd.xlane.f32.xlu0 %v1818
  %v1820 = vpop.xlane.xlu0 %1819
  %v1821 = vld [vmem:[%s2 + $0x3] sm:$0x1]
  %v1822 = vlaneseq
  %v1823 = vshrl.u32 %v1822, 7
  %v1824 = vsub.s32 0, %v1823
  %v1825 = vrot.slane %v1821, %v1824
  %v1826 = vadd.f32 %v1820, %v1825
  %v1827 = vxor.u32 %v1826, 2147483648
  %v1828 = vmul.f32 %v1827, 1.442695
  %v1829 = vpow.pop %v1828
  %v1830 = vadd.f32 %v1829, 1.0
  %v1831 = vrcp.pop %v1830
  %v1832 = vmul.f32 1.0, %v1831
  %vm1833 = vcmask 1024
  %1834 = vst.msk [vmem:[%s5] sm:$0x3] %vm1833, %v1832
  // Predicated region
  $region22: #{transformer_voter_forward.1} parent=0 // pred_check
    _
  $region23: #{transformer_voter_forward.1} parent=0 // pred_check_branch
    %1836 = sbr.rel (0) target = $region25
  $region24: #{transformer_voter_forward.1} parent=0 // pred_region
    _
  $region25: #{transformer_voter_forward.1} parent=0 // pred_fallthru
    _
  // Predicated region
  $region26: #{transformer_voter_forward.1} parent=0 // pred_check
    _
  $region27: #{transformer_voter_forward.1} parent=0 // pred_check_branch
    %1838 = sbr.rel (0) target = $region29
  $region28: #{transformer_voter_forward.1} parent=0 // pred_region
    _
  $region29: #{transformer_voter_forward.1} parent=0 // pred_fallthru
    _

</llo_original>
